<compile_context>
chip_gen: v5e
topology: v5e:2x2
jax: 0.10.0
libtpu: 0.0.40
codegen_flags: <defaults>
</compile_context>

<pallas_src>
import functools

import jax
import jax.numpy as jnp
from jax.experimental import pallas as pl
from jax.experimental.pallas import tpu as pltpu


def encoder_kernel(x_ref,
                   w1_ref, b1_ref,
                   w2_ref, b2_ref,
                   w3_ref, b3_ref,
                   o_ref, *, bt, lc, chunk_l, n_chunks, l_orig, l_padded):
    """One grid step: batch tile i (bt elements), L-chunk k (lc points each).

    x_ref : (C_in, lc*bt) bf16, lanes ordered l-major / batch-minor.
    o_ref : (C3, bt) f32 running max, resident across the L-chunk grid axis.
    """
    k = pl.program_id(1)

    @pl.when(k == 0)
    def _init():
        # ReLU outputs are >= 0, so 0 is an exact identity for the running max.
        o_ref[...] = jnp.zeros_like(o_ref)

    # Hoist constant operands out of the chunk loop.
    w1 = w1_ref[...]
    w2 = w2_ref[...]
    w3 = w3_ref[...]
    b1 = b1_ref[...]          # bf16 (C1, 1)
    b2 = b2_ref[...]          # bf16 (C2, 1)
    b3 = b3_ref[...]          # f32  (C3, 1)

    chunk_lanes = chunk_l * bt
    mask_l = l_padded != l_orig   # static (trace-time) decision

    def chunk_body(c, acc):
        start = pl.multiple_of(c * chunk_lanes, 128)
        xc = x_ref[:, pl.ds(start, chunk_lanes)]                     # (C_in, ch) bf16

        # Layer 1-2: MXU matmul (f32 acc), bf16 bias + ReLU epilogue.
        h = jnp.dot(w1, xc, preferred_element_type=jnp.float32)
        h = jnp.maximum(h.astype(jnp.bfloat16) + b1, 0)              # (C1, ch) bf16
        h = jnp.dot(w2, h, preferred_element_type=jnp.float32)
        h = jnp.maximum(h.astype(jnp.bfloat16) + b2, 0)              # (C2, ch) bf16
        # Layer 3: keep f32 for the max epilogue.
        h = jnp.dot(w3, h, preferred_element_type=jnp.float32)
        h = jnp.maximum(h + b3, 0.0)                                  # (C3, ch) f32

        # Segmented max over the chunk's l-slices: each slice is a lane-aligned
        # (C3, bt) block (bt is a multiple of 128) -> plain VPU maximum.
        for j in range(chunk_l):
            s = h[:, j * bt:(j + 1) * bt]
            if mask_l:
                gl = k * lc + c * chunk_l + j
                s = jnp.where(gl < l_orig, s, 0.0)   # exact: values are >= 0
            acc = jnp.maximum(acc, s)
        return acc

    acc0 = jnp.zeros(o_ref.shape, jnp.float32)
    acc = jax.lax.fori_loop(0, n_chunks, chunk_body, acc0,
                            unroll=(n_chunks <= 4))
    o_ref[...] = jnp.maximum(o_ref[...], acc)


def fold_bn_into_conv(w, conv_b, gamma, beta, mean, var, eps=1e-5):
    """Fold eval-mode BatchNorm1d into the Conv1d(k=1) weight and bias.

    Returns (w_folded_bf16 (Cout, Cin), bias_f32 (Cout, 1)).
    """
    s = gamma / jnp.sqrt(var + eps)
    w_f = (s[:, None] * w).astype(jnp.bfloat16)
    b_f = (s * (conv_b - mean) + beta).astype(jnp.float32)[:, None]
    return w_f, b_f


def _round_up(x, m):
    return ((x + m - 1) // m) * m


def _choose_tiling(B, L, *, target_lanes=8192, chunk_lanes=1024, bt_max=512):
    """Pick (Bp, bt, Lp, lc, n_l_steps, chunk_l, n_chunks).

    Bp: padded batch (multiple of 128); bt: batch-tile width (lane-dense output).
    lc: l-values per grid step (lanes/step = lc*bt ~ target_lanes).
    chunk_l: l-values per in-kernel compute chunk (~chunk_lanes lanes).
    """
    bt_max = max(bt_max, 128)
    Bp = _round_up(max(B, 1), 128)
    bt_cands = [bt for bt in range(128, min(Bp, bt_max) + 1, 128) if Bp % bt == 0]
    two_tile = [bt for bt in bt_cands if Bp // bt >= 2]   # use both TCs on v7x
    bt = max(two_tile) if two_tile else max(bt_cands)

    lc = max(1, min(L, target_lanes // bt))
    Lp = _round_up(L, lc)
    n_l_steps = Lp // lc

    chunk_l = max(1, min(lc, max(1, chunk_lanes // bt)))
    while lc % chunk_l != 0:
        chunk_l -= 1
    n_chunks = lc // chunk_l
    return Bp, bt, Lp, lc, n_l_steps, chunk_l, n_chunks


def encoder_forward(x, folded_params, *, target_lanes=8192, chunk_lanes=1024,
                    bt_max=512):
    B, C_in, L = x.shape
    (w1, b1), (w2, b2), (w3, b3) = folded_params
    C3 = w3.shape[0]

    Bp, bt, Lp, lc, n_l_steps, chunk_l, n_chunks = _choose_tiling(
        B, L, target_lanes=target_lanes, chunk_lanes=chunk_lanes, bt_max=bt_max)
    n_b_tiles = Bp // bt
    lanes_per_step = lc * bt

    # Layout plumbing in XLA (outside the kernel):
    # (B, C_in, L) -> pad -> (C_in, [batch tile][l][batch-in-tile]) bf16.
    xpad = x
    if Bp != B or Lp != L:
        xpad = jnp.pad(x, ((0, Bp - B), (0, 0), (0, Lp - L)))
    xp = xpad.reshape(n_b_tiles, bt, C_in, Lp)
    xp = jnp.transpose(xp, (2, 0, 3, 1)).reshape(C_in, n_b_tiles * Lp * bt)
    xp = xp.astype(jnp.bfloat16)

    b1c = b1.astype(jnp.bfloat16)
    b2c = b2.astype(jnp.bfloat16)
    b3c = b3.astype(jnp.float32)

    const = lambda a: pl.BlockSpec(a.shape, lambda i, k: (0, 0))
    kern = functools.partial(encoder_kernel, bt=bt, lc=lc, chunk_l=chunk_l,
                             n_chunks=n_chunks, l_orig=L, l_padded=Lp)

    out = pl.pallas_call(
        kern,
        out_shape=jax.ShapeDtypeStruct((C3, Bp), jnp.float32),
        grid=(n_b_tiles, n_l_steps),
        in_specs=[
            pl.BlockSpec((C_in, lanes_per_step),
                         lambda i, k: (0, i * n_l_steps + k)),
            const(w1), const(b1c),
            const(w2), const(b2c),
            const(w3), const(b3c),
        ],
        out_specs=pl.BlockSpec((C3, bt), lambda i, k: (0, i)),
        compiler_params=pltpu.CompilerParams(
            dimension_semantics=("parallel", "arbitrary"),
            vmem_limit_bytes=32 * 1024 * 1024),
    )(xp, w1, b1c, w2, b2c, w3, b3c)

    # (C3, Bp) lane-dense slab -> (B, C3)
    return jnp.transpose(out[:, :B], (1, 0))


def reference_forward(x, folded_params):
    """Pure-JAX reference mirroring the kernel's precision policy."""
    h = x.astype(jnp.bfloat16)
    n = len(folded_params)
    for idx, (w, b) in enumerate(folded_params):
        h = jnp.einsum('oc,bcl->bol', w, h, preferred_element_type=jnp.float32)
        if idx < n - 1:
            h = jnp.maximum(h.astype(jnp.bfloat16) + b.astype(jnp.bfloat16)[None], 0)
        else:
            h = jnp.maximum(h + b[None], 0.0)
    return jnp.max(h.astype(jnp.float32), axis=-1)


if __name__ == "__main__":
    B, C_in, L = 2, 4, 16
    n_filters = [C_in, 32, 64, 64]

    key = jax.random.PRNGKey(0)
    folded_params = []
    for i in range(len(n_filters) - 1):
        cin, cout = n_filters[i], n_filters[i + 1]
        key, kw, kb = jax.random.split(key, 3)
        # Conv1d(kernel_size=1) weight (cout, cin, 1) -> squeeze to (cout, cin)
        w = (jax.random.normal(kw, (cout, cin), jnp.float32)
             * (1.0 / jnp.sqrt(cin)))
        conv_b = jax.random.normal(kb, (cout,), jnp.float32) * 0.01
        # BatchNorm1d default (eval) stats: gamma=1, beta=0, mean=0, var=1
        gamma = jnp.ones((cout,), jnp.float32)
        beta = jnp.zeros((cout,), jnp.float32)
        mean = jnp.zeros((cout,), jnp.float32)
        var = jnp.ones((cout,), jnp.float32)
        folded_params.append(fold_bn_into_conv(w, conv_b, gamma, beta, mean, var))
    # TODO(synk): training-mode BatchNorm / Dropout not modeled (inference
    # semantics); this config has dropout_prob=0 and closing=None so the
    # forward matches exactly.

    key, kx = jax.random.split(key)
    x = jax.random.normal(kx, (B, C_in, L), jnp.float32)

    out = encoder_forward(x, folded_params)
    out = jax.block_until_ready(out)

    ref = reference_forward(x, folded_params)
    assert out.shape == (B, n_filters[-1])
    assert bool(jnp.all(jnp.isfinite(out)))
    assert jnp.allclose(out, ref, atol=1e-2, rtol=1e-2), "mismatch vs reference"

    print("KERNEL_OK")
</pallas_src>

<mosaic_0001>
module attributes {stable_mosaic.version = 11 : i64} {
  func.func @encoder_kernel(%arg0: i32, %arg1: i32, %arg2: memref<4x2048xbf16, #tpu.memory_space<vmem>>, %arg3: memref<32x4xbf16, #tpu.memory_space<vmem>>, %arg4: memref<32x1xbf16, #tpu.memory_space<vmem>>, %arg5: memref<64x32xbf16, #tpu.memory_space<vmem>>, %arg6: memref<64x1xbf16, #tpu.memory_space<vmem>>, %arg7: memref<64x64xbf16, #tpu.memory_space<vmem>>, %arg8: memref<64x1xf32, #tpu.memory_space<vmem>>, %arg9: memref<64x128xf32, #tpu.memory_space<vmem>>) attributes {dimension_semantics = [#tpu.dimension_semantics<parallel>, #tpu.dimension_semantics<arbitrary>], iteration_bounds = array<i64: 1, 1>, scalar_prefetch = 0 : i64, scratch_operands = 0 : i64, tpu.core_type = #tpu.core_type<tc>, window_params = [{transform_indices = @transform_0, window_bounds = array<i64: 4, 2048>}, {pipeline_mode = #tpu.pipeline_mode<synchronous>, transform_indices = @transform_1, window_bounds = array<i64: 32, 4>}, {pipeline_mode = #tpu.pipeline_mode<synchronous>, transform_indices = @transform_2, window_bounds = array<i64: 32, 1>}, {pipeline_mode = #tpu.pipeline_mode<synchronous>, transform_indices = @transform_3, window_bounds = array<i64: 64, 32>}, {pipeline_mode = #tpu.pipeline_mode<synchronous>, transform_indices = @transform_4, window_bounds = array<i64: 64, 1>}, {pipeline_mode = #tpu.pipeline_mode<synchronous>, transform_indices = @transform_5, window_bounds = array<i64: 64, 64>}, {pipeline_mode = #tpu.pipeline_mode<synchronous>, transform_indices = @transform_6, window_bounds = array<i64: 64, 1>}, {transform_indices = @transform_7, window_bounds = array<i64: 64, 128>}]} {
    %c0_i32 = arith.constant 0 : i32
    %0 = arith.cmpi eq, %arg1, %c0_i32 : i32
    %1 = arith.extui %0 : i1 to i32
    %c0_i32_0 = arith.constant 0 : i32
    %2 = arith.cmpi ne, %1, %c0_i32_0 : i32
    scf.if %2 {
      %cst_32 = arith.constant 0.000000e+00 : f32
      %87 = vector.broadcast %cst_32 : f32 to vector<64x128xf32>
      %c0_33 = arith.constant 0 : index
      %c0_34 = arith.constant 0 : index
      %88 = vector.load %arg9[%c0_33, %c0_34] : memref<64x128xf32, #tpu.memory_space<vmem>>, vector<64x128xf32>
      tpu.vector_store %arg9[%c0_33, %c0_34], %87 {strides = array<i32>} : memref<64x128xf32, #tpu.memory_space<vmem>>, vector<64x128xf32>,
    } else {
    }
    %c0 = arith.constant 0 : index
    %c0_1 = arith.constant 0 : index
    %3 = vector.load %arg3[%c0, %c0_1] : memref<32x4xbf16, #tpu.memory_space<vmem>>, vector<32x4xbf16>
    %c0_2 = arith.constant 0 : index
    %c0_3 = arith.constant 0 : index
    %4 = vector.load %arg5[%c0_2, %c0_3] : memref<64x32xbf16, #tpu.memory_space<vmem>>, vector<64x32xbf16>
    %c0_4 = arith.constant 0 : index
    %c0_5 = arith.constant 0 : index
    %5 = vector.load %arg7[%c0_4, %c0_5] : memref<64x64xbf16, #tpu.memory_space<vmem>>, vector<64x64xbf16>
    %c0_6 = arith.constant 0 : index
    %c0_7 = arith.constant 0 : index
    %6 = vector.load %arg4[%c0_6, %c0_7] : memref<32x1xbf16, #tpu.memory_space<vmem>>, vector<32x1xbf16>
    %c0_8 = arith.constant 0 : index
    %c0_9 = arith.constant 0 : index
    %7 = vector.load %arg6[%c0_8, %c0_9] : memref<64x1xbf16, #tpu.memory_space<vmem>>, vector<64x1xbf16>
    %c0_10 = arith.constant 0 : index
    %c0_11 = arith.constant 0 : index
    %8 = vector.load %arg8[%c0_10, %c0_11] : memref<64x1xf32, #tpu.memory_space<vmem>>, vector<64x1xf32>
    %cst = arith.constant 0.000000e+00 : f32
    %9 = vector.broadcast %cst : f32 to vector<64x128xf32>
    %c0_i32_12 = arith.constant 0 : i32
    %c1024_i32 = arith.constant 1024 : i32
    %10 = arith.muli %c0_i32_12, %c1024_i32 : i32
    %11 = tpu.assume_multiple %10, 128 : i32
    %c0_13 = arith.constant 0 : index
    %12 = arith.index_cast %11 : i32 to index
    %13 = vector.load %arg2[%c0_13, %12] : memref<4x2048xbf16, #tpu.memory_space<vmem>>, vector<4x1024xbf16>
    %cst_14 = arith.constant dense<0.000000e+00> : vector<32x1024xf32>
    %14 = tpu.matmul %3, %13, %cst_14 {dimension_numbers = #tpu.dot_dimension_numbers<[1], [0], [0], [1], [0, 0, 1, 1], [], []>} : vector<32x4xbf16>, vector<4x1024xbf16>, vector<32x1024xf32> -> vector<32x1024xf32>
    %15 = arith.truncf %14 : vector<32x1024xf32> to vector<32x1024xbf16>
    %16 = vector.broadcast %6 : vector<32x1xbf16> to vector<32x1024xbf16>
    %17 = arith.addf %15, %16 : vector<32x1024xbf16>
    %cst_15 = arith.constant 0.000000e+00 : bf16
    %18 = vector.broadcast %cst_15 : bf16 to vector<32x1024xbf16>
    %19 = arith.maximumf %17, %18 : vector<32x1024xbf16>
    %cst_16 = arith.constant dense<0.000000e+00> : vector<64x1024xf32>
    %20 = tpu.matmul %4, %19, %cst_16 {dimension_numbers = #tpu.dot_dimension_numbers<[1], [0], [0], [1], [0, 0, 1, 1], [], []>} : vector<64x32xbf16>, vector<32x1024xbf16>, vector<64x1024xf32> -> vector<64x1024xf32>
    %21 = arith.truncf %20 : vector<64x1024xf32> to vector<64x1024xbf16>
    %22 = vector.broadcast %7 : vector<64x1xbf16> to vector<64x1024xbf16>
    %23 = arith.addf %21, %22 : vector<64x1024xbf16>
    %cst_17 = arith.constant 0.000000e+00 : bf16
    %24 = vector.broadcast %cst_17 : bf16 to vector<64x1024xbf16>
    %25 = arith.maximumf %23, %24 : vector<64x1024xbf16>
    %cst_18 = arith.constant dense<0.000000e+00> : vector<64x1024xf32>
    %26 = tpu.matmul %5, %25, %cst_18 {dimension_numbers = #tpu.dot_dimension_numbers<[1], [0], [0], [1], [0, 0, 1, 1], [], []>} : vector<64x64xbf16>, vector<64x1024xbf16>, vector<64x1024xf32> -> vector<64x1024xf32>
    %27 = vector.broadcast %8 : vector<64x1xf32> to vector<64x1024xf32>
    %28 = arith.addf %26, %27 : vector<64x1024xf32>
    %cst_19 = arith.constant 0.000000e+00 : f32
    %29 = vector.broadcast %cst_19 : f32 to vector<64x1024xf32>
    %30 = arith.maximumf %28, %29 : vector<64x1024xf32>
    %31 = vector.extract_strided_slice %30 {offsets = [0, 0], sizes = [64, 128], strides = [1, 1]} : vector<64x1024xf32> to vector<64x128xf32>
    %32 = arith.maximumf %9, %31 : vector<64x128xf32>
    %33 = vector.extract_strided_slice %30 {offsets = [0, 128], sizes = [64, 128], strides = [1, 1]} : vector<64x1024xf32> to vector<64x128xf32>
    %34 = arith.maximumf %32, %33 : vector<64x128xf32>
    %35 = vector.extract_strided_slice %30 {offsets = [0, 256], sizes = [64, 128], strides = [1, 1]} : vector<64x1024xf32> to vector<64x128xf32>
    %36 = arith.maximumf %34, %35 : vector<64x128xf32>
    %37 = vector.extract_strided_slice %30 {offsets = [0, 384], sizes = [64, 128], strides = [1, 1]} : vector<64x1024xf32> to vector<64x128xf32>
    %38 = arith.maximumf %36, %37 : vector<64x128xf32>
    %39 = vector.extract_strided_slice %30 {offsets = [0, 512], sizes = [64, 128], strides = [1, 1]} : vector<64x1024xf32> to vector<64x128xf32>
    %40 = arith.maximumf %38, %39 : vector<64x128xf32>
    %41 = vector.extract_strided_slice %30 {offsets = [0, 640], sizes = [64, 128], strides = [1, 1]} : vector<64x1024xf32> to vector<64x128xf32>
    %42 = arith.maximumf %40, %41 : vector<64x128xf32>
    %43 = vector.extract_strided_slice %30 {offsets = [0, 768], sizes = [64, 128], strides = [1, 1]} : vector<64x1024xf32> to vector<64x128xf32>
    %44 = arith.maximumf %42, %43 : vector<64x128xf32>
    %45 = vector.extract_strided_slice %30 {offsets = [0, 896], sizes = [64, 128], strides = [1, 1]} : vector<64x1024xf32> to vector<64x128xf32>
    %46 = arith.maximumf %44, %45 : vector<64x128xf32>
    %c1_i32 = arith.constant 1 : i32
    %c1024_i32_20 = arith.constant 1024 : i32
    %47 = arith.muli %c1_i32, %c1024_i32_20 : i32
    %48 = tpu.assume_multiple %47, 128 : i32
    %c0_21 = arith.constant 0 : index
    %49 = arith.index_cast %48 : i32 to index
    %50 = vector.load %arg2[%c0_21, %49] : memref<4x2048xbf16, #tpu.memory_space<vmem>>, vector<4x1024xbf16>
    %cst_22 = arith.constant dense<0.000000e+00> : vector<32x1024xf32>
    %51 = tpu.matmul %3, %50, %cst_22 {dimension_numbers = #tpu.dot_dimension_numbers<[1], [0], [0], [1], [0, 0, 1, 1], [], []>} : vector<32x4xbf16>, vector<4x1024xbf16>, vector<32x1024xf32> -> vector<32x1024xf32>
    %52 = arith.truncf %51 : vector<32x1024xf32> to vector<32x1024xbf16>
    %53 = vector.broadcast %6 : vector<32x1xbf16> to vector<32x1024xbf16>
    %54 = arith.addf %52, %53 : vector<32x1024xbf16>
    %cst_23 = arith.constant 0.000000e+00 : bf16
    %55 = vector.broadcast %cst_23 : bf16 to vector<32x1024xbf16>
    %56 = arith.maximumf %54, %55 : vector<32x1024xbf16>
    %cst_24 = arith.constant dense<0.000000e+00> : vector<64x1024xf32>
    %57 = tpu.matmul %4, %56, %cst_24 {dimension_numbers = #tpu.dot_dimension_numbers<[1], [0], [0], [1], [0, 0, 1, 1], [], []>} : vector<64x32xbf16>, vector<32x1024xbf16>, vector<64x1024xf32> -> vector<64x1024xf32>
    %58 = arith.truncf %57 : vector<64x1024xf32> to vector<64x1024xbf16>
    %59 = vector.broadcast %7 : vector<64x1xbf16> to vector<64x1024xbf16>
    %60 = arith.addf %58, %59 : vector<64x1024xbf16>
    %cst_25 = arith.constant 0.000000e+00 : bf16
    %61 = vector.broadcast %cst_25 : bf16 to vector<64x1024xbf16>
    %62 = arith.maximumf %60, %61 : vector<64x1024xbf16>
    %cst_26 = arith.constant dense<0.000000e+00> : vector<64x1024xf32>
    %63 = tpu.matmul %5, %62, %cst_26 {dimension_numbers = #tpu.dot_dimension_numbers<[1], [0], [0], [1], [0, 0, 1, 1], [], []>} : vector<64x64xbf16>, vector<64x1024xbf16>, vector<64x1024xf32> -> vector<64x1024xf32>
    %64 = vector.broadcast %8 : vector<64x1xf32> to vector<64x1024xf32>
    %65 = arith.addf %63, %64 : vector<64x1024xf32>
    %cst_27 = arith.constant 0.000000e+00 : f32
    %66 = vector.broadcast %cst_27 : f32 to vector<64x1024xf32>
    %67 = arith.maximumf %65, %66 : vector<64x1024xf32>
    %68 = vector.extract_strided_slice %67 {offsets = [0, 0], sizes = [64, 128], strides = [1, 1]} : vector<64x1024xf32> to vector<64x128xf32>
    %69 = arith.maximumf %46, %68 : vector<64x128xf32>
    %70 = vector.extract_strided_slice %67 {offsets = [0, 128], sizes = [64, 128], strides = [1, 1]} : vector<64x1024xf32> to vector<64x128xf32>
    %71 = arith.maximumf %69, %70 : vector<64x128xf32>
    %72 = vector.extract_strided_slice %67 {offsets = [0, 256], sizes = [64, 128], strides = [1, 1]} : vector<64x1024xf32> to vector<64x128xf32>
    %73 = arith.maximumf %71, %72 : vector<64x128xf32>
    %74 = vector.extract_strided_slice %67 {offsets = [0, 384], sizes = [64, 128], strides = [1, 1]} : vector<64x1024xf32> to vector<64x128xf32>
    %75 = arith.maximumf %73, %74 : vector<64x128xf32>
    %76 = vector.extract_strided_slice %67 {offsets = [0, 512], sizes = [64, 128], strides = [1, 1]} : vector<64x1024xf32> to vector<64x128xf32>
    %77 = arith.maximumf %75, %76 : vector<64x128xf32>
    %78 = vector.extract_strided_slice %67 {offsets = [0, 640], sizes = [64, 128], strides = [1, 1]} : vector<64x1024xf32> to vector<64x128xf32>
    %79 = arith.maximumf %77, %78 : vector<64x128xf32>
    %80 = vector.extract_strided_slice %67 {offsets = [0, 768], sizes = [64, 128], strides = [1, 1]} : vector<64x1024xf32> to vector<64x128xf32>
    %81 = arith.maximumf %79, %80 : vector<64x128xf32>
    %82 = vector.extract_strided_slice %67 {offsets = [0, 896], sizes = [64, 128], strides = [1, 1]} : vector<64x1024xf32> to vector<64x128xf32>
    %83 = arith.maximumf %81, %82 : vector<64x128xf32>
    %c2_i32 = arith.constant 2 : i32
    %c0_28 = arith.constant 0 : index
    %c0_29 = arith.constant 0 : index
    %84 = vector.load %arg9[%c0_28, %c0_29] : memref<64x128xf32, #tpu.memory_space<vmem>>, vector<64x128xf32>
    %85 = arith.maximumf %84, %83 : vector<64x128xf32>
    %c0_30 = arith.constant 0 : index
    %c0_31 = arith.constant 0 : index
    %86 = vector.load %arg9[%c0_30, %c0_31] : memref<64x128xf32, #tpu.memory_space<vmem>>, vector<64x128xf32>
    tpu.vector_store %arg9[%c0_30, %c0_31], %85 {strides = array<i32>} : memref<64x128xf32, #tpu.memory_space<vmem>>, vector<64x128xf32>,
    return
  }
  func.func @transform_0(%arg0: i32, %arg1: i32) -> (i32, i32) {
    %c1_i32 = arith.constant 1 : i32
    %0 = arith.muli %arg0, %c1_i32 : i32
    %1 = arith.addi %0, %arg1 : i32
    %c0_i32 = arith.constant 0 : i32
    %c0_i32_0 = arith.constant 0 : i32
    return %c0_i32, %1 : i32, i32
  }
  func.func @transform_1(%arg0: i32, %arg1: i32) -> (i32, i32) {
    %c0_i32 = arith.constant 0 : i32
    %c0_i32_0 = arith.constant 0 : i32
    %c0_i32_1 = arith.constant 0 : i32
    return %c0_i32, %c0_i32_0 : i32, i32
  }
  func.func @transform_2(%arg0: i32, %arg1: i32) -> (i32, i32) {
    %c0_i32 = arith.constant 0 : i32
    %c0_i32_0 = arith.constant 0 : i32
    %c0_i32_1 = arith.constant 0 : i32
    return %c0_i32, %c0_i32_0 : i32, i32
  }
  func.func @transform_3(%arg0: i32, %arg1: i32) -> (i32, i32) {
    %c0_i32 = arith.constant 0 : i32
    %c0_i32_0 = arith.constant 0 : i32
    %c0_i32_1 = arith.constant 0 : i32
    return %c0_i32, %c0_i32_0 : i32, i32
  }
  func.func @transform_4(%arg0: i32, %arg1: i32) -> (i32, i32) {
    %c0_i32 = arith.constant 0 : i32
    %c0_i32_0 = arith.constant 0 : i32
    %c0_i32_1 = arith.constant 0 : i32
    return %c0_i32, %c0_i32_0 : i32, i32
  }
  func.func @transform_5(%arg0: i32, %arg1: i32) -> (i32, i32) {
    %c0_i32 = arith.constant 0 : i32
    %c0_i32_0 = arith.constant 0 : i32
    %c0_i32_1 = arith.constant 0 : i32
    return %c0_i32, %c0_i32_0 : i32, i32
  }
  func.func @transform_6(%arg0: i32, %arg1: i32) -> (i32, i32) {
    %c0_i32 = arith.constant 0 : i32
    %c0_i32_0 = arith.constant 0 : i32
    %c0_i32_1 = arith.constant 0 : i32
    return %c0_i32, %c0_i32_0 : i32, i32
  }
  func.func @transform_7(%arg0: i32, %arg1: i32) -> (i32, i32) {
    %c0_i32 = arith.constant 0 : i32
    %c0_i32_0 = arith.constant 0 : i32
    return %c0_i32, %arg0 : i32, i32
  }
}

</mosaic_0001>

<llo_original>
// kernel: tpu_custom_call.1
$region0: #{tpu_custom_call.1}
  #allocation0 [shape = 'u32[]', space=smem, size = 0x4, offset = 0x4, fixed_abs, tag = 'smem constant byte address 0x4 - core index']
  #allocation1 [shape = 'u32[72,128]{1,0:T(1,128)}', space=vmem, size = 0x9000, scoped, tag = 'internal scratch']
  %s0 = inlined_call_operand.vmem [shape: bf16[4,2048], index: 0, kind: input, shape index: {}]
  %s1 = inlined_call_operand.vmem [shape: bf16[32,4], index: 1, kind: input, shape index: {}]
  %s2 = inlined_call_operand.vmem [shape: bf16[32,1], index: 2, kind: input, shape index: {}]
  %s3 = inlined_call_operand.vmem [shape: bf16[64,32], index: 3, kind: input, shape index: {}]
  %s4 = inlined_call_operand.vmem [shape: bf16[64,1], index: 4, kind: input, shape index: {}]
  %s5 = inlined_call_operand.vmem [shape: bf16[64,64], index: 5, kind: input, shape index: {}]
  %s6 = inlined_call_operand.vmem [shape: f32[64,1], index: 6, kind: input, shape index: {}]
  %s7 = inlined_call_operand.hbm [shape: f32[64,128], index: 7, kind: output, shape index: {}]
  %s8 = sld [smem:[#allocation0]]
  $region42: #{tpu_custom_call.1} parent=0
    _
  %s10 = ssub.s32 1, %s8
  %s11 = scalar_select 0, %s10, %s8
  $region1: #{tpu_custom_call.1} parent=0
    #allocation2 [shape = 'u8[32768]{0}', space=vmem, size = 0x8000, scoped, tag = 'output window, operand 0, single buffered']
    #allocation3 [shape = 's32[1]{0}', space=sflag, size = 0x4, scoped, tag = 'scoped memory for tpu_custom_call.1']
    %12 = vsyncpa [#allocation3], 0
    // Predicated region
    $region2: #{tpu_custom_call.1} parent=1 // pred_check
      _
    $region3: #{tpu_custom_call.1} parent=1 // pred_check_branch
      %14 = sbr.rel (0) target = $region5
    $region4: #{tpu_custom_call.1} parent=1 // pred_region
      %s15 = sadd.s32 0, 0
      %s16 = smul.u32 16, %s15
      %p17 = scmp.lt.s32.totalorder %s16, 15
      %s18 = scalar_select %p17, %s16, 15
      %s19 = smul.addr %s18, 2
      %s20 = scalar_lea.vmem %s0, %s19
      %s21 = sadd.s32 0, 0
      %s22 = smul.u32 16, %s21
    $region5: #{tpu_custom_call.1} parent=1 // pred_fallthru
      _
    // Predicated region
    $region6: #{tpu_custom_call.1} parent=1 // pred_check
      _
    $region7: #{tpu_custom_call.1} parent=1 // pred_check_branch
      %24 = sbr.rel (0) target = $region9
    $region8: #{tpu_custom_call.1} parent=1 // pred_region
      _
    $region9: #{tpu_custom_call.1} parent=1 // pred_fallthru
      _
    // Predicated region
    $region10: #{tpu_custom_call.1} parent=1 // pred_check
      _
    $region11: #{tpu_custom_call.1} parent=1 // pred_check_branch
      %26 = sbr.rel (0) target = $region13
    $region12: #{tpu_custom_call.1} parent=1 // pred_region
      _
    $region13: #{tpu_custom_call.1} parent=1 // pred_fallthru
      _
    // Predicated region
    $region14: #{tpu_custom_call.1} parent=1 // pred_check
      _
    $region15: #{tpu_custom_call.1} parent=1 // pred_check_branch
      %28 = sbr.rel (0) target = $region17
    $region16: #{tpu_custom_call.1} parent=1 // pred_region
      _
    $region17: #{tpu_custom_call.1} parent=1 // pred_fallthru
      _
    // Predicated region
    $region18: #{tpu_custom_call.1} parent=1 // pred_check
      _
    $region19: #{tpu_custom_call.1} parent=1 // pred_check_branch
      %30 = sbr.rel (0) target = $region21
    $region20: #{tpu_custom_call.1} parent=1 // pred_region
      _
    $region21: #{tpu_custom_call.1} parent=1 // pred_fallthru
      _
    // Predicated region
    $region22: #{tpu_custom_call.1} parent=1 // pred_check
      _
    $region23: #{tpu_custom_call.1} parent=1 // pred_check_branch
      %32 = sbr.rel (0) target = $region25
    $region24: #{tpu_custom_call.1} parent=1 // pred_region
      _
    $region25: #{tpu_custom_call.1} parent=1 // pred_fallthru
      _
    // Predicated region
    $region26: #{tpu_custom_call.1} parent=1 // pred_check
      _
    $region27: #{tpu_custom_call.1} parent=1 // pred_check_branch
      %34 = sbr.rel (0) target = $region29
    $region28: #{tpu_custom_call.1} parent=1 // pred_region
      _
    $region29: #{tpu_custom_call.1} parent=1 // pred_fallthru
      _
    %s35 = sadd.s32 0, 0
    %s36 = smul.u32 16, %s35
    %p37 = scmp.lt.s32.totalorder %s36, 15
    %s38 = scalar_select %p37, %s36, 15
    %s39 = smul.addr %s38, 2
    %s40 = scalar_lea.vmem %s0, %s39
    %s41 = sadd.s32 0, 0
    %s42 = smul.u32 16, %s41
    %p43 = scmp.lt.s32.totalorder %s42, 15
    %s44 = scalar_select %p43, %s42, 15
    %s45 = smul.addr %s44, 2
    %s46 = scalar_lea.vmem %s0, %s45
    %s47 = sadd.s32 0, 0
    %s48 = smul.u32 16, %s47
    %p50 = scmp.eq.s32.totalorder 0, 0
    // Predicated region
    $region30: #{tpu_custom_call.1} parent=1 // pred_check
      %p51 = pneg %p50
    $region31: #{tpu_custom_call.1} parent=1 // pred_check_branch
      %53 = sbr.rel (%p51) target = $region33
    $region32: #{tpu_custom_call.1} parent=1 // pred_region
      %54 = vst [vmem:[#allocation2] sm:$0xff] 0.0
      %55 = vst [vmem:[#allocation2 + $0x8] sm:$0xff] 0.0
      %56 = vst [vmem:[#allocation2 + $0x10] sm:$0xff] 0.0
      %57 = vst [vmem:[#allocation2 + $0x18] sm:$0xff] 0.0
      %58 = vst [vmem:[#allocation2 + $0x20] sm:$0xff] 0.0
      %59 = vst [vmem:[#allocation2 + $0x28] sm:$0xff] 0.0
      %60 = vst [vmem:[#allocation2 + $0x30] sm:$0xff] 0.0
      %61 = vst [vmem:[#allocation2 + $0x38] sm:$0xff] 0.0
    $region33: #{tpu_custom_call.1} parent=1 // pred_fallthru
      _
    %v62 = vld [vmem:[%s1] sm:$0xf]
    %v63 = vld [vmem:[%s1 + $0x4] sm:$0xf]
    %v64 = vld [vmem:[%s1 + $0x8] sm:$0xf]
    %v65 = vld [vmem:[%s1 + $0xc] sm:$0xf]
    %v66 = vld [vmem:[%s3] sm:$0xf]
    %v67 = vld [vmem:[%s3 + $0x4] sm:$0xf]
    %v68 = vld [vmem:[%s3 + $0x8] sm:$0xf]
    %v69 = vld [vmem:[%s3 + $0xc] sm:$0xf]
    %v70 = vld [vmem:[%s3 + $0x10] sm:$0xf]
    %v71 = vld [vmem:[%s3 + $0x14] sm:$0xf]
    %v72 = vld [vmem:[%s3 + $0x18] sm:$0xf]
    %v73 = vld [vmem:[%s3 + $0x1c] sm:$0xf]
    %v74 = vld [vmem:[%s5] sm:$0xf]
    %v75 = vld [vmem:[%s5 + $0x4] sm:$0xf]
    %v76 = vld [vmem:[%s5 + $0x8] sm:$0xf]
    %v77 = vld [vmem:[%s5 + $0xc] sm:$0xf]
    %v78 = vld [vmem:[%s5 + $0x10] sm:$0xf]
    %v79 = vld [vmem:[%s5 + $0x14] sm:$0xf]
    %v80 = vld [vmem:[%s5 + $0x18] sm:$0xf]
    %v81 = vld [vmem:[%s5 + $0x1c] sm:$0xf]
    %v82 = vld [vmem:[%s2] sm:$0xf]
    %v83 = vld [vmem:[%s2 + $0x4] sm:$0xf]
    %v84 = vld [vmem:[%s2 + $0x8] sm:$0xf]
    %v85 = vld [vmem:[%s2 + $0xc] sm:$0xf]
    %v86 = vld [vmem:[%s4] sm:$0xf]
    %v87 = vld [vmem:[%s4 + $0x4] sm:$0xf]
    %v88 = vld [vmem:[%s4 + $0x8] sm:$0xf]
    %v89 = vld [vmem:[%s4 + $0xc] sm:$0xf]
    %v90 = vld [vmem:[%s4 + $0x10] sm:$0xf]
    %v91 = vld [vmem:[%s4 + $0x14] sm:$0xf]
    %v92 = vld [vmem:[%s4 + $0x18] sm:$0xf]
    %v93 = vld [vmem:[%s4 + $0x1c] sm:$0xf]
    %v94 = vld [vmem:[%s6] sm:$0xff]
    %v95 = vld [vmem:[%s6 + $0x8] sm:$0xff]
    %v96 = vld [vmem:[%s6 + $0x10] sm:$0xff]
    %v97 = vld [vmem:[%s6 + $0x18] sm:$0xff]
    %v98 = vld [vmem:[%s6 + $0x20] sm:$0xff]
    %v99 = vld [vmem:[%s6 + $0x28] sm:$0xff]
    %v100 = vld [vmem:[%s6 + $0x30] sm:$0xff]
    %v101 = vld [vmem:[%s6 + $0x38] sm:$0xff]
    %v102 = vld [vmem:[%s46] sm:$0xff]
    %v103 = vld [vmem:[%s46 + $0x8] sm:$0xff]
    %v108 = vunpack.c.l.b16 %v62
    %v109 = vunpack.c.l.b16 %v63
    %v110 = vunpack.c.l.b16 %v64
    %v111 = vunpack.c.l.b16 %v65
    %v112 = vpack.c.b16 %v109, %v108
    %v113 = vpack.c.b16 %v111, %v110
    %115 = vst [vmem:[#allocation1] ss:$4 sm:$0xff] %v102
    %s117 = scalar_lea.vmem [#allocation1], 32
    %118 = vst [vmem:[%s117] ss:$4 sm:$0xff] %v103
    %v119 = vld.sshfl [vmem:[#allocation1] sm:$0xff pattern:$0x73625140]
    %v120 = vld.sshfl [vmem:[#allocation1 + $0x8] sm:$0xff pattern:$0x73625140]
    %v121 = vld.sshfl [vmem:[#allocation1 + $0x10] sm:$0xff pattern:$0x73625140]
    %v122 = vld.sshfl [vmem:[#allocation1 + $0x18] sm:$0xff pattern:$0x73625140]
    %v123 = vld.sshfl [vmem:[#allocation1 + $0x20] sm:$0xff pattern:$0x73625140]
    %v124 = vld.sshfl [vmem:[#allocation1 + $0x28] sm:$0xff pattern:$0x73625140]
    %v125 = vld.sshfl [vmem:[#allocation1 + $0x30] sm:$0xff pattern:$0x73625140]
    %v126 = vld.sshfl [vmem:[#allocation1 + $0x38] sm:$0xff pattern:$0x73625140]
    %vm127 = vcmask 31744
    %v129 = vsel %vm127, %v112, 0
    %v132 = vsel %vm127, %v113, 0
    %vm134 = vcmask 1041408
    %v135 = vsel %vm134, %v119, 0
    %v137 = vsel %vm134, %v120, 0
    %v139 = vsel %vm134, %v121, 0
    %v141 = vsel %vm134, %v122, 0
    %v143 = vsel %vm134, %v123, 0
    %v145 = vsel %vm134, %v124, 0
    %v147 = vsel %vm134, %v125, 0
    %v149 = vsel %vm134, %v126, 0
    %151 = vmatpush.bf16.msra.mxu0 0
    %152 = vmatpush.bf16.msra.mxu0 0
    %153 = vmatpush.bf16.msra.mxu0 0
    %154 = vmatpush.bf16.msra.mxu0 0
    %155 = vmatpush.bf16.msra.mxu0 0
    %156 = vmatpush.bf16.msra.mxu0 0
    %157 = vmatpush.bf16.msra.mxu0 0
    %158 = vmatpush.bf16.msra.mxu0 %v135
    %159 = vmatmul.bf16.gmra.mxu0 %v129
    %v160 = vpop.f32.mrf.mxu0
    %v161 = vadd.f32 0.0, %v160
    %v162 = vpop.f32.mrf.mxu0
    %v163 = vadd.f32 0.0, %v162
    %164 = vmatmul.bf16.gmra.mxu0 %v132
    %v165 = vpop.f32.mrf.mxu0
    %v166 = vadd.f32 0.0, %v165
    %v167 = vpop.f32.mrf.mxu0
    %v168 = vadd.f32 0.0, %v167
    %169 = vdwg.mxu0
    %170 = vmatpush.bf16.msra.mxu0 0
    %171 = vmatpush.bf16.msra.mxu0 0
    %172 = vmatpush.bf16.msra.mxu0 0
    %173 = vmatpush.bf16.msra.mxu0 0
    %174 = vmatpush.bf16.msra.mxu0 0
    %175 = vmatpush.bf16.msra.mxu0 0
    %176 = vmatpush.bf16.msra.mxu0 0
    %177 = vmatpush.bf16.msra.mxu0 %v137
    %178 = vmatmul.bf16.gmra.mxu0 %v129
    %v179 = vpop.f32.mrf.mxu0
    %v180 = vadd.f32 0.0, %v179
    %v181 = vpop.f32.mrf.mxu0
    %v182 = vadd.f32 0.0, %v181
    %183 = vmatmul.bf16.gmra.mxu0 %v132
    %v184 = vpop.f32.mrf.mxu0
    %v185 = vadd.f32 0.0, %v184
    %v186 = vpop.f32.mrf.mxu0
    %v187 = vadd.f32 0.0, %v186
    %188 = vdwg.mxu0
    %189 = vmatpush.bf16.msra.mxu0 0
    %190 = vmatpush.bf16.msra.mxu0 0
    %191 = vmatpush.bf16.msra.mxu0 0
    %192 = vmatpush.bf16.msra.mxu0 0
    %193 = vmatpush.bf16.msra.mxu0 0
    %194 = vmatpush.bf16.msra.mxu0 0
    %195 = vmatpush.bf16.msra.mxu0 0
    %196 = vmatpush.bf16.msra.mxu0 %v139
    %197 = vmatmul.bf16.gmra.mxu0 %v129
    %v198 = vpop.f32.mrf.mxu0
    %v199 = vadd.f32 0.0, %v198
    %v200 = vpop.f32.mrf.mxu0
    %v201 = vadd.f32 0.0, %v200
    %202 = vmatmul.bf16.gmra.mxu0 %v132
    %v203 = vpop.f32.mrf.mxu0
    %v204 = vadd.f32 0.0, %v203
    %v205 = vpop.f32.mrf.mxu0
    %v206 = vadd.f32 0.0, %v205
    %207 = vdwg.mxu0
    %208 = vmatpush.bf16.msra.mxu0 0
    %209 = vmatpush.bf16.msra.mxu0 0
    %210 = vmatpush.bf16.msra.mxu0 0
    %211 = vmatpush.bf16.msra.mxu0 0
    %212 = vmatpush.bf16.msra.mxu0 0
    %213 = vmatpush.bf16.msra.mxu0 0
    %214 = vmatpush.bf16.msra.mxu0 0
    %215 = vmatpush.bf16.msra.mxu0 %v141
    %216 = vmatmul.bf16.gmra.mxu0 %v129
    %v217 = vpop.f32.mrf.mxu0
    %v218 = vadd.f32 0.0, %v217
    %v219 = vpop.f32.mrf.mxu0
    %v220 = vadd.f32 0.0, %v219
    %221 = vmatmul.bf16.gmra.mxu0 %v132
    %v222 = vpop.f32.mrf.mxu0
    %v223 = vadd.f32 0.0, %v222
    %v224 = vpop.f32.mrf.mxu0
    %v225 = vadd.f32 0.0, %v224
    %226 = vdwg.mxu0
    %227 = vmatpush.bf16.msra.mxu0 0
    %228 = vmatpush.bf16.msra.mxu0 0
    %229 = vmatpush.bf16.msra.mxu0 0
    %230 = vmatpush.bf16.msra.mxu0 0
    %231 = vmatpush.bf16.msra.mxu0 0
    %232 = vmatpush.bf16.msra.mxu0 0
    %233 = vmatpush.bf16.msra.mxu0 0
    %234 = vmatpush.bf16.msra.mxu0 %v143
    %235 = vmatmul.bf16.gmra.mxu0 %v129
    %v236 = vpop.f32.mrf.mxu0
    %v237 = vadd.f32 0.0, %v236
    %v238 = vpop.f32.mrf.mxu0
    %v239 = vadd.f32 0.0, %v238
    %240 = vmatmul.bf16.gmra.mxu0 %v132
    %v241 = vpop.f32.mrf.mxu0
    %v242 = vadd.f32 0.0, %v241
    %v243 = vpop.f32.mrf.mxu0
    %v244 = vadd.f32 0.0, %v243
    %245 = vdwg.mxu0
    %246 = vmatpush.bf16.msra.mxu0 0
    %247 = vmatpush.bf16.msra.mxu0 0
    %248 = vmatpush.bf16.msra.mxu0 0
    %249 = vmatpush.bf16.msra.mxu0 0
    %250 = vmatpush.bf16.msra.mxu0 0
    %251 = vmatpush.bf16.msra.mxu0 0
    %252 = vmatpush.bf16.msra.mxu0 0
    %253 = vmatpush.bf16.msra.mxu0 %v145
    %254 = vmatmul.bf16.gmra.mxu0 %v129
    %v255 = vpop.f32.mrf.mxu0
    %v256 = vadd.f32 0.0, %v255
    %v257 = vpop.f32.mrf.mxu0
    %v258 = vadd.f32 0.0, %v257
    %259 = vmatmul.bf16.gmra.mxu0 %v132
    %v260 = vpop.f32.mrf.mxu0
    %v261 = vadd.f32 0.0, %v260
    %v262 = vpop.f32.mrf.mxu0
    %v263 = vadd.f32 0.0, %v262
    %264 = vdwg.mxu0
    %265 = vmatpush.bf16.msra.mxu0 0
    %266 = vmatpush.bf16.msra.mxu0 0
    %267 = vmatpush.bf16.msra.mxu0 0
    %268 = vmatpush.bf16.msra.mxu0 0
    %269 = vmatpush.bf16.msra.mxu0 0
    %270 = vmatpush.bf16.msra.mxu0 0
    %271 = vmatpush.bf16.msra.mxu0 0
    %272 = vmatpush.bf16.msra.mxu0 %v147
    %273 = vmatmul.bf16.gmra.mxu0 %v129
    %v274 = vpop.f32.mrf.mxu0
    %v275 = vadd.f32 0.0, %v274
    %v276 = vpop.f32.mrf.mxu0
    %v277 = vadd.f32 0.0, %v276
    %278 = vmatmul.bf16.gmra.mxu0 %v132
    %v279 = vpop.f32.mrf.mxu0
    %v280 = vadd.f32 0.0, %v279
    %v281 = vpop.f32.mrf.mxu0
    %v282 = vadd.f32 0.0, %v281
    %283 = vdwg.mxu0
    %284 = vmatpush.bf16.msra.mxu0 0
    %285 = vmatpush.bf16.msra.mxu0 0
    %286 = vmatpush.bf16.msra.mxu0 0
    %287 = vmatpush.bf16.msra.mxu0 0
    %288 = vmatpush.bf16.msra.mxu0 0
    %289 = vmatpush.bf16.msra.mxu0 0
    %290 = vmatpush.bf16.msra.mxu0 0
    %291 = vmatpush.bf16.msra.mxu0 %v149
    %292 = vmatmul.bf16.gmra.mxu0 %v129
    %v293 = vpop.f32.mrf.mxu0
    %v294 = vadd.f32 0.0, %v293
    %v295 = vpop.f32.mrf.mxu0
    %v296 = vadd.f32 0.0, %v295
    %297 = vmatmul.bf16.gmra.mxu0 %v132
    %v298 = vpop.f32.mrf.mxu0
    %v299 = vadd.f32 0.0, %v298
    %v300 = vpop.f32.mrf.mxu0
    %v301 = vadd.f32 0.0, %v300
    %302 = vdwg.mxu0
    %v303 = vpack.c.bf16 %v180, %v161
    %v304 = vpack.c.bf16 %v218, %v199
    %v305 = vpack.c.bf16 %v256, %v237
    %v306 = vpack.c.bf16 %v294, %v275
    %v307 = vpack.c.bf16 %v182, %v163
    %v308 = vpack.c.bf16 %v220, %v201
    %v309 = vpack.c.bf16 %v258, %v239
    %v310 = vpack.c.bf16 %v296, %v277
    %v311 = vpack.c.bf16 %v185, %v166
    %v312 = vpack.c.bf16 %v223, %v204
    %v313 = vpack.c.bf16 %v261, %v242
    %v314 = vpack.c.bf16 %v299, %v280
    %v315 = vpack.c.bf16 %v187, %v168
    %v316 = vpack.c.bf16 %v225, %v206
    %v317 = vpack.c.bf16 %v263, %v244
    %v318 = vpack.c.bf16 %v301, %v282
    %320 = vset.pattern.permute.xlu0 0
    %321 = vperm.xlu0 %320, %v82
    %v322 = vpop.permute.xlu0 %321
    %v325 = vunpack.c.l.s4 839922192
    %v326 = vunpack.c.0.s8 %v325
    %v327 = vperm.slane %v322, %v326
    %329 = vset.pattern.permute.xlu0 0
    %330 = vperm.xlu0 %329, %v83
    %v331 = vpop.permute.xlu0 %330
    %v334 = vunpack.c.l.s4 839922192
    %v335 = vunpack.c.0.s8 %v334
    %v336 = vperm.slane %v331, %v335
    %338 = vset.pattern.permute.xlu0 0
    %339 = vperm.xlu0 %338, %v84
    %v340 = vpop.permute.xlu0 %339
    %v343 = vunpack.c.l.s4 839922192
    %v344 = vunpack.c.0.s8 %v343
    %v345 = vperm.slane %v340, %v344
    %347 = vset.pattern.permute.xlu0 0
    %348 = vperm.xlu0 %347, %v85
    %v349 = vpop.permute.xlu0 %348
    %v352 = vunpack.c.l.s4 839922192
    %v353 = vunpack.c.0.s8 %v352
    %v354 = vperm.slane %v349, %v353
    %v355 = vunpack.c.l.bf16 %v303
    %v356 = vunpack.c.h.bf16 %v303
    %v357 = vunpack.c.l.bf16 %v304
    %v358 = vunpack.c.h.bf16 %v304
    %v359 = vunpack.c.l.bf16 %v305
    %v360 = vunpack.c.h.bf16 %v305
    %v361 = vunpack.c.l.bf16 %v306
    %v362 = vunpack.c.h.bf16 %v306
    %v363 = vunpack.c.l.bf16 %v307
    %v364 = vunpack.c.h.bf16 %v307
    %v365 = vunpack.c.l.bf16 %v308
    %v366 = vunpack.c.h.bf16 %v308
    %v367 = vunpack.c.l.bf16 %v309
    %v368 = vunpack.c.h.bf16 %v309
    %v369 = vunpack.c.l.bf16 %v310
    %v370 = vunpack.c.h.bf16 %v310
    %v371 = vunpack.c.l.bf16 %v311
    %v372 = vunpack.c.h.bf16 %v311
    %v373 = vunpack.c.l.bf16 %v312
    %v374 = vunpack.c.h.bf16 %v312
    %v375 = vunpack.c.l.bf16 %v313
    %v376 = vunpack.c.h.bf16 %v313
    %v377 = vunpack.c.l.bf16 %v314
    %v378 = vunpack.c.h.bf16 %v314
    %v379 = vunpack.c.l.bf16 %v315
    %v380 = vunpack.c.h.bf16 %v315
    %v381 = vunpack.c.l.bf16 %v316
    %v382 = vunpack.c.h.bf16 %v316
    %v383 = vunpack.c.l.bf16 %v317
    %v384 = vunpack.c.h.bf16 %v317
    %v385 = vunpack.c.l.bf16 %v318
    %v386 = vunpack.c.h.bf16 %v318
    %v387 = vunpack.c.l.bf16 %v327
    %v388 = vunpack.c.l.bf16 %v336
    %v389 = vunpack.c.l.bf16 %v345
    %v390 = vunpack.c.l.bf16 %v354
    %v391 = vadd.f32 %v355, %v387
    %v392 = vadd.f32 %v356, %v387
    %v393 = vadd.f32 %v357, %v387
    %v394 = vadd.f32 %v358, %v387
    %v395 = vadd.f32 %v359, %v387
    %v396 = vadd.f32 %v360, %v387
    %v397 = vadd.f32 %v361, %v387
    %v398 = vadd.f32 %v362, %v387
    %v399 = vadd.f32 %v363, %v388
    %v400 = vadd.f32 %v364, %v388
    %v401 = vadd.f32 %v365, %v388
    %v402 = vadd.f32 %v366, %v388
    %v403 = vadd.f32 %v367, %v388
    %v404 = vadd.f32 %v368, %v388
    %v405 = vadd.f32 %v369, %v388
    %v406 = vadd.f32 %v370, %v388
    %v407 = vadd.f32 %v371, %v389
    %v408 = vadd.f32 %v372, %v389
    %v409 = vadd.f32 %v373, %v389
    %v410 = vadd.f32 %v374, %v389
    %v411 = vadd.f32 %v375, %v389
    %v412 = vadd.f32 %v376, %v389
    %v413 = vadd.f32 %v377, %v389
    %v414 = vadd.f32 %v378, %v389
    %v415 = vadd.f32 %v379, %v390
    %v416 = vadd.f32 %v380, %v390
    %v417 = vadd.f32 %v381, %v390
    %v418 = vadd.f32 %v382, %v390
    %v419 = vadd.f32 %v383, %v390
    %v420 = vadd.f32 %v384, %v390
    %v421 = vadd.f32 %v385, %v390
    %v422 = vadd.f32 %v386, %v390
    %v423 = vpack.c.bf16 %v392, %v391
    %v424 = vpack.c.bf16 %v394, %v393
    %v425 = vpack.c.bf16 %v396, %v395
    %v426 = vpack.c.bf16 %v398, %v397
    %v427 = vpack.c.bf16 %v400, %v399
    %v428 = vpack.c.bf16 %v402, %v401
    %v429 = vpack.c.bf16 %v404, %v403
    %v430 = vpack.c.bf16 %v406, %v405
    %v431 = vpack.c.bf16 %v408, %v407
    %v432 = vpack.c.bf16 %v410, %v409
    %v433 = vpack.c.bf16 %v412, %v411
    %v434 = vpack.c.bf16 %v414, %v413
    %v435 = vpack.c.bf16 %v416, %v415
    %v436 = vpack.c.bf16 %v418, %v417
    %v437 = vpack.c.bf16 %v420, %v419
    %v438 = vpack.c.bf16 %v422, %v421
    %v439 = vunpack.c.l.bf16 %v423
    %v440 = vunpack.c.h.bf16 %v423
    %v441 = vunpack.c.l.bf16 %v424
    %v442 = vunpack.c.h.bf16 %v424
    %v443 = vunpack.c.l.bf16 %v425
    %v444 = vunpack.c.h.bf16 %v425
    %v445 = vunpack.c.l.bf16 %v426
    %v446 = vunpack.c.h.bf16 %v426
    %v447 = vunpack.c.l.bf16 %v427
    %v448 = vunpack.c.h.bf16 %v427
    %v449 = vunpack.c.l.bf16 %v428
    %v450 = vunpack.c.h.bf16 %v428
    %v451 = vunpack.c.l.bf16 %v429
    %v452 = vunpack.c.h.bf16 %v429
    %v453 = vunpack.c.l.bf16 %v430
    %v454 = vunpack.c.h.bf16 %v430
    %v455 = vunpack.c.l.bf16 %v431
    %v456 = vunpack.c.h.bf16 %v431
    %v457 = vunpack.c.l.bf16 %v432
    %v458 = vunpack.c.h.bf16 %v432
    %v459 = vunpack.c.l.bf16 %v433
    %v460 = vunpack.c.h.bf16 %v433
    %v461 = vunpack.c.l.bf16 %v434
    %v462 = vunpack.c.h.bf16 %v434
    %v463 = vunpack.c.l.bf16 %v435
    %v464 = vunpack.c.h.bf16 %v435
    %v465 = vunpack.c.l.bf16 %v436
    %v466 = vunpack.c.h.bf16 %v436
    %v467 = vunpack.c.l.bf16 %v437
    %v468 = vunpack.c.h.bf16 %v437
    %v469 = vunpack.c.l.bf16 %v438
    %v470 = vunpack.c.h.bf16 %v438
    %v471 = vmax.f32 %v439, 0.0
    %v472 = vmax.f32 %v440, 0.0
    %v473 = vmax.f32 %v441, 0.0
    %v474 = vmax.f32 %v442, 0.0
    %v475 = vmax.f32 %v443, 0.0
    %v476 = vmax.f32 %v444, 0.0
    %v477 = vmax.f32 %v445, 0.0
    %v478 = vmax.f32 %v446, 0.0
    %v479 = vmax.f32 %v447, 0.0
    %v480 = vmax.f32 %v448, 0.0
    %v481 = vmax.f32 %v449, 0.0
    %v482 = vmax.f32 %v450, 0.0
    %v483 = vmax.f32 %v451, 0.0
    %v484 = vmax.f32 %v452, 0.0
    %v485 = vmax.f32 %v453, 0.0
    %v486 = vmax.f32 %v454, 0.0
    %v487 = vmax.f32 %v455, 0.0
    %v488 = vmax.f32 %v456, 0.0
    %v489 = vmax.f32 %v457, 0.0
    %v490 = vmax.f32 %v458, 0.0
    %v491 = vmax.f32 %v459, 0.0
    %v492 = vmax.f32 %v460, 0.0
    %v493 = vmax.f32 %v461, 0.0
    %v494 = vmax.f32 %v462, 0.0
    %v495 = vmax.f32 %v463, 0.0
    %v496 = vmax.f32 %v464, 0.0
    %v497 = vmax.f32 %v465, 0.0
    %v498 = vmax.f32 %v466, 0.0
    %v499 = vmax.f32 %v467, 0.0
    %v500 = vmax.f32 %v468, 0.0
    %v501 = vmax.f32 %v469, 0.0
    %v502 = vmax.f32 %v470, 0.0
    %v503 = vpack.c.bf16 %v479, %v471
    %v504 = vpack.c.bf16 %v480, %v472
    %v505 = vpack.c.bf16 %v481, %v473
    %v506 = vpack.c.bf16 %v482, %v474
    %v507 = vpack.c.bf16 %v483, %v475
    %v508 = vpack.c.bf16 %v484, %v476
    %v509 = vpack.c.bf16 %v485, %v477
    %v510 = vpack.c.bf16 %v486, %v478
    %v511 = vpack.c.bf16 %v495, %v487
    %v512 = vpack.c.bf16 %v496, %v488
    %v513 = vpack.c.bf16 %v497, %v489
    %v514 = vpack.c.bf16 %v498, %v490
    %v515 = vpack.c.bf16 %v499, %v491
    %v516 = vpack.c.bf16 %v500, %v492
    %v517 = vpack.c.bf16 %v501, %v493
    %v518 = vpack.c.bf16 %v502, %v494
    %v527 = vunpack.c.l.b16 %v66
    %v528 = vunpack.c.l.b16 %v67
    %v529 = vunpack.c.l.b16 %v68
    %v530 = vunpack.c.l.b16 %v69
    %v531 = vunpack.c.l.b16 %v70
    %v532 = vunpack.c.l.b16 %v71
    %v533 = vunpack.c.l.b16 %v72
    %v534 = vunpack.c.l.b16 %v73
    %v535 = vpack.c.b16 %v528, %v527
    %v536 = vpack.c.b16 %v530, %v529
    %v537 = vpack.c.b16 %v532, %v531
    %v538 = vpack.c.b16 %v534, %v533
    %vm539 = vcmask 261120
    %v541 = vsel %vm539, %v535, 0
    %v544 = vsel %vm539, %v536, 0
    %v547 = vsel %vm539, %v537, 0
    %v550 = vsel %vm539, %v538, 0
    %552 = vmatpush.bf16.msra.mxu0 0
    %553 = vmatpush.bf16.msra.mxu0 0
    %554 = vmatpush.bf16.msra.mxu0 0
    %555 = vmatpush.bf16.msra.mxu0 0
    %556 = vmatpush.bf16.msra.mxu0 0
    %557 = vmatpush.bf16.msra.mxu0 0
    %558 = vmatpush.bf16.msra.mxu0 %v511
    %559 = vmatpush.bf16.msra.mxu0 %v503
    %560 = vmatmul.bf16.gmra.mxu0 %v541
    %v561 = vpop.f32.mrf.mxu0
    %v562 = vadd.f32 0.0, %v561
    %v563 = vpop.f32.mrf.mxu0
    %v564 = vadd.f32 0.0, %v563
    %565 = vmatmul.bf16.gmra.mxu0 %v544
    %v566 = vpop.f32.mrf.mxu0
    %v567 = vadd.f32 0.0, %v566
    %v568 = vpop.f32.mrf.mxu0
    %v569 = vadd.f32 0.0, %v568
    %570 = vmatmul.bf16.gmra.mxu0 %v547
    %v571 = vpop.f32.mrf.mxu0
    %v572 = vadd.f32 0.0, %v571
    %v573 = vpop.f32.mrf.mxu0
    %v574 = vadd.f32 0.0, %v573
    %575 = vmatmul.bf16.gmra.mxu0 %v550
    %v576 = vpop.f32.mrf.mxu0
    %v577 = vadd.f32 0.0, %v576
    %v578 = vpop.f32.mrf.mxu0
    %v579 = vadd.f32 0.0, %v578
    %580 = vdwg.mxu0
    %581 = vmatpush.bf16.msra.mxu0 0
    %582 = vmatpush.bf16.msra.mxu0 0
    %583 = vmatpush.bf16.msra.mxu0 0
    %584 = vmatpush.bf16.msra.mxu0 0
    %585 = vmatpush.bf16.msra.mxu0 0
    %586 = vmatpush.bf16.msra.mxu0 0
    %587 = vmatpush.bf16.msra.mxu0 %v512
    %588 = vmatpush.bf16.msra.mxu0 %v504
    %589 = vmatmul.bf16.gmra.mxu0 %v541
    %v590 = vpop.f32.mrf.mxu0
    %v591 = vadd.f32 0.0, %v590
    %v592 = vpop.f32.mrf.mxu0
    %v593 = vadd.f32 0.0, %v592
    %594 = vmatmul.bf16.gmra.mxu0 %v544
    %v595 = vpop.f32.mrf.mxu0
    %v596 = vadd.f32 0.0, %v595
    %v597 = vpop.f32.mrf.mxu0
    %v598 = vadd.f32 0.0, %v597
    %599 = vmatmul.bf16.gmra.mxu0 %v547
    %v600 = vpop.f32.mrf.mxu0
    %v601 = vadd.f32 0.0, %v600
    %v602 = vpop.f32.mrf.mxu0
    %v603 = vadd.f32 0.0, %v602
    %604 = vmatmul.bf16.gmra.mxu0 %v550
    %v605 = vpop.f32.mrf.mxu0
    %v606 = vadd.f32 0.0, %v605
    %v607 = vpop.f32.mrf.mxu0
    %v608 = vadd.f32 0.0, %v607
    %609 = vdwg.mxu0
    %610 = vmatpush.bf16.msra.mxu0 0
    %611 = vmatpush.bf16.msra.mxu0 0
    %612 = vmatpush.bf16.msra.mxu0 0
    %613 = vmatpush.bf16.msra.mxu0 0
    %614 = vmatpush.bf16.msra.mxu0 0
    %615 = vmatpush.bf16.msra.mxu0 0
    %616 = vmatpush.bf16.msra.mxu0 %v513
    %617 = vmatpush.bf16.msra.mxu0 %v505
    %618 = vmatmul.bf16.gmra.mxu0 %v541
    %v619 = vpop.f32.mrf.mxu0
    %v620 = vadd.f32 0.0, %v619
    %v621 = vpop.f32.mrf.mxu0
    %v622 = vadd.f32 0.0, %v621
    %623 = vmatmul.bf16.gmra.mxu0 %v544
    %v624 = vpop.f32.mrf.mxu0
    %v625 = vadd.f32 0.0, %v624
    %v626 = vpop.f32.mrf.mxu0
    %v627 = vadd.f32 0.0, %v626
    %628 = vmatmul.bf16.gmra.mxu0 %v547
    %v629 = vpop.f32.mrf.mxu0
    %v630 = vadd.f32 0.0, %v629
    %v631 = vpop.f32.mrf.mxu0
    %v632 = vadd.f32 0.0, %v631
    %633 = vmatmul.bf16.gmra.mxu0 %v550
    %v634 = vpop.f32.mrf.mxu0
    %v635 = vadd.f32 0.0, %v634
    %v636 = vpop.f32.mrf.mxu0
    %v637 = vadd.f32 0.0, %v636
    %638 = vdwg.mxu0
    %639 = vmatpush.bf16.msra.mxu0 0
    %640 = vmatpush.bf16.msra.mxu0 0
    %641 = vmatpush.bf16.msra.mxu0 0
    %642 = vmatpush.bf16.msra.mxu0 0
    %643 = vmatpush.bf16.msra.mxu0 0
    %644 = vmatpush.bf16.msra.mxu0 0
    %645 = vmatpush.bf16.msra.mxu0 %v514
    %646 = vmatpush.bf16.msra.mxu0 %v506
    %647 = vmatmul.bf16.gmra.mxu0 %v541
    %v648 = vpop.f32.mrf.mxu0
    %v649 = vadd.f32 0.0, %v648
    %v650 = vpop.f32.mrf.mxu0
    %v651 = vadd.f32 0.0, %v650
    %652 = vmatmul.bf16.gmra.mxu0 %v544
    %v653 = vpop.f32.mrf.mxu0
    %v654 = vadd.f32 0.0, %v653
    %v655 = vpop.f32.mrf.mxu0
    %v656 = vadd.f32 0.0, %v655
    %657 = vmatmul.bf16.gmra.mxu0 %v547
    %v658 = vpop.f32.mrf.mxu0
    %v659 = vadd.f32 0.0, %v658
    %v660 = vpop.f32.mrf.mxu0
    %v661 = vadd.f32 0.0, %v660
    %662 = vmatmul.bf16.gmra.mxu0 %v550
    %v663 = vpop.f32.mrf.mxu0
    %v664 = vadd.f32 0.0, %v663
    %v665 = vpop.f32.mrf.mxu0
    %v666 = vadd.f32 0.0, %v665
    %667 = vdwg.mxu0
    %668 = vmatpush.bf16.msra.mxu0 0
    %669 = vmatpush.bf16.msra.mxu0 0
    %670 = vmatpush.bf16.msra.mxu0 0
    %671 = vmatpush.bf16.msra.mxu0 0
    %672 = vmatpush.bf16.msra.mxu0 0
    %673 = vmatpush.bf16.msra.mxu0 0
    %674 = vmatpush.bf16.msra.mxu0 %v515
    %675 = vmatpush.bf16.msra.mxu0 %v507
    %676 = vmatmul.bf16.gmra.mxu0 %v541
    %v677 = vpop.f32.mrf.mxu0
    %v678 = vadd.f32 0.0, %v677
    %v679 = vpop.f32.mrf.mxu0
    %v680 = vadd.f32 0.0, %v679
    %681 = vmatmul.bf16.gmra.mxu0 %v544
    %v682 = vpop.f32.mrf.mxu0
    %v683 = vadd.f32 0.0, %v682
    %v684 = vpop.f32.mrf.mxu0
    %v685 = vadd.f32 0.0, %v684
    %686 = vmatmul.bf16.gmra.mxu0 %v547
    %v687 = vpop.f32.mrf.mxu0
    %v688 = vadd.f32 0.0, %v687
    %v689 = vpop.f32.mrf.mxu0
    %v690 = vadd.f32 0.0, %v689
    %691 = vmatmul.bf16.gmra.mxu0 %v550
    %v692 = vpop.f32.mrf.mxu0
    %v693 = vadd.f32 0.0, %v692
    %v694 = vpop.f32.mrf.mxu0
    %v695 = vadd.f32 0.0, %v694
    %696 = vdwg.mxu0
    %697 = vmatpush.bf16.msra.mxu0 0
    %698 = vmatpush.bf16.msra.mxu0 0
    %699 = vmatpush.bf16.msra.mxu0 0
    %700 = vmatpush.bf16.msra.mxu0 0
    %701 = vmatpush.bf16.msra.mxu0 0
    %702 = vmatpush.bf16.msra.mxu0 0
    %703 = vmatpush.bf16.msra.mxu0 %v516
    %704 = vmatpush.bf16.msra.mxu0 %v508
    %705 = vmatmul.bf16.gmra.mxu0 %v541
    %v706 = vpop.f32.mrf.mxu0
    %v707 = vadd.f32 0.0, %v706
    %v708 = vpop.f32.mrf.mxu0
    %v709 = vadd.f32 0.0, %v708
    %710 = vmatmul.bf16.gmra.mxu0 %v544
    %v711 = vpop.f32.mrf.mxu0
    %v712 = vadd.f32 0.0, %v711
    %v713 = vpop.f32.mrf.mxu0
    %v714 = vadd.f32 0.0, %v713
    %715 = vmatmul.bf16.gmra.mxu0 %v547
    %v716 = vpop.f32.mrf.mxu0
    %v717 = vadd.f32 0.0, %v716
    %v718 = vpop.f32.mrf.mxu0
    %v719 = vadd.f32 0.0, %v718
    %720 = vmatmul.bf16.gmra.mxu0 %v550
    %v721 = vpop.f32.mrf.mxu0
    %v722 = vadd.f32 0.0, %v721
    %v723 = vpop.f32.mrf.mxu0
    %v724 = vadd.f32 0.0, %v723
    %725 = vdwg.mxu0
    %726 = vmatpush.bf16.msra.mxu0 0
    %727 = vmatpush.bf16.msra.mxu0 0
    %728 = vmatpush.bf16.msra.mxu0 0
    %729 = vmatpush.bf16.msra.mxu0 0
    %730 = vmatpush.bf16.msra.mxu0 0
    %731 = vmatpush.bf16.msra.mxu0 0
    %732 = vmatpush.bf16.msra.mxu0 %v517
    %733 = vmatpush.bf16.msra.mxu0 %v509
    %734 = vmatmul.bf16.gmra.mxu0 %v541
    %v735 = vpop.f32.mrf.mxu0
    %v736 = vadd.f32 0.0, %v735
    %v737 = vpop.f32.mrf.mxu0
    %v738 = vadd.f32 0.0, %v737
    %739 = vmatmul.bf16.gmra.mxu0 %v544
    %v740 = vpop.f32.mrf.mxu0
    %v741 = vadd.f32 0.0, %v740
    %v742 = vpop.f32.mrf.mxu0
    %v743 = vadd.f32 0.0, %v742
    %744 = vmatmul.bf16.gmra.mxu0 %v547
    %v745 = vpop.f32.mrf.mxu0
    %v746 = vadd.f32 0.0, %v745
    %v747 = vpop.f32.mrf.mxu0
    %v748 = vadd.f32 0.0, %v747
    %749 = vmatmul.bf16.gmra.mxu0 %v550
    %v750 = vpop.f32.mrf.mxu0
    %v751 = vadd.f32 0.0, %v750
    %v752 = vpop.f32.mrf.mxu0
    %v753 = vadd.f32 0.0, %v752
    %754 = vdwg.mxu0
    %755 = vmatpush.bf16.msra.mxu0 0
    %756 = vmatpush.bf16.msra.mxu0 0
    %757 = vmatpush.bf16.msra.mxu0 0
    %758 = vmatpush.bf16.msra.mxu0 0
    %759 = vmatpush.bf16.msra.mxu0 0
    %760 = vmatpush.bf16.msra.mxu0 0
    %761 = vmatpush.bf16.msra.mxu0 %v518
    %762 = vmatpush.bf16.msra.mxu0 %v510
    %763 = vmatmul.bf16.gmra.mxu0 %v541
    %v764 = vpop.f32.mrf.mxu0
    %v765 = vadd.f32 0.0, %v764
    %v766 = vpop.f32.mrf.mxu0
    %v767 = vadd.f32 0.0, %v766
    %768 = vmatmul.bf16.gmra.mxu0 %v544
    %v769 = vpop.f32.mrf.mxu0
    %v770 = vadd.f32 0.0, %v769
    %v771 = vpop.f32.mrf.mxu0
    %v772 = vadd.f32 0.0, %v771
    %773 = vmatmul.bf16.gmra.mxu0 %v547
    %v774 = vpop.f32.mrf.mxu0
    %v775 = vadd.f32 0.0, %v774
    %v776 = vpop.f32.mrf.mxu0
    %v777 = vadd.f32 0.0, %v776
    %778 = vmatmul.bf16.gmra.mxu0 %v550
    %v779 = vpop.f32.mrf.mxu0
    %v780 = vadd.f32 0.0, %v779
    %v781 = vpop.f32.mrf.mxu0
    %v782 = vadd.f32 0.0, %v781
    %783 = vdwg.mxu0
    %v784 = vpack.c.bf16 %v591, %v562
    %v785 = vpack.c.bf16 %v649, %v620
    %v786 = vpack.c.bf16 %v707, %v678
    %v787 = vpack.c.bf16 %v765, %v736
    %v788 = vpack.c.bf16 %v593, %v564
    %v789 = vpack.c.bf16 %v651, %v622
    %v790 = vpack.c.bf16 %v709, %v680
    %v791 = vpack.c.bf16 %v767, %v738
    %v792 = vpack.c.bf16 %v596, %v567
    %v793 = vpack.c.bf16 %v654, %v625
    %v794 = vpack.c.bf16 %v712, %v683
    %v795 = vpack.c.bf16 %v770, %v741
    %v796 = vpack.c.bf16 %v598, %v569
    %v797 = vpack.c.bf16 %v656, %v627
    %v798 = vpack.c.bf16 %v714, %v685
    %v799 = vpack.c.bf16 %v772, %v743
    %v800 = vpack.c.bf16 %v601, %v572
    %v801 = vpack.c.bf16 %v659, %v630
    %v802 = vpack.c.bf16 %v717, %v688
    %v803 = vpack.c.bf16 %v775, %v746
    %v804 = vpack.c.bf16 %v603, %v574
    %v805 = vpack.c.bf16 %v661, %v632
    %v806 = vpack.c.bf16 %v719, %v690
    %v807 = vpack.c.bf16 %v777, %v748
    %v808 = vpack.c.bf16 %v606, %v577
    %v809 = vpack.c.bf16 %v664, %v635
    %v810 = vpack.c.bf16 %v722, %v693
    %v811 = vpack.c.bf16 %v780, %v751
    %v812 = vpack.c.bf16 %v608, %v579
    %v813 = vpack.c.bf16 %v666, %v637
    %v814 = vpack.c.bf16 %v724, %v695
    %v815 = vpack.c.bf16 %v782, %v753
    %817 = vset.pattern.permute.xlu0 0
    %818 = vperm.xlu0 %817, %v86
    %v819 = vpop.permute.xlu0 %818
    %v822 = vunpack.c.l.s4 839922192
    %v823 = vunpack.c.0.s8 %v822
    %v824 = vperm.slane %v819, %v823
    %826 = vset.pattern.permute.xlu0 0
    %827 = vperm.xlu0 %826, %v87
    %v828 = vpop.permute.xlu0 %827
    %v831 = vunpack.c.l.s4 839922192
    %v832 = vunpack.c.0.s8 %v831
    %v833 = vperm.slane %v828, %v832
    %835 = vset.pattern.permute.xlu0 0
    %836 = vperm.xlu0 %835, %v88
    %v837 = vpop.permute.xlu0 %836
    %v840 = vunpack.c.l.s4 839922192
    %v841 = vunpack.c.0.s8 %v840
    %v842 = vperm.slane %v837, %v841
    %844 = vset.pattern.permute.xlu0 0
    %845 = vperm.xlu0 %844, %v89
    %v846 = vpop.permute.xlu0 %845
    %v849 = vunpack.c.l.s4 839922192
    %v850 = vunpack.c.0.s8 %v849
    %v851 = vperm.slane %v846, %v850
    %853 = vset.pattern.permute.xlu0 0
    %854 = vperm.xlu0 %853, %v90
    %v855 = vpop.permute.xlu0 %854
    %v858 = vunpack.c.l.s4 839922192
    %v859 = vunpack.c.0.s8 %v858
    %v860 = vperm.slane %v855, %v859
    %862 = vset.pattern.permute.xlu0 0
    %863 = vperm.xlu0 %862, %v91
    %v864 = vpop.permute.xlu0 %863
    %v867 = vunpack.c.l.s4 839922192
    %v868 = vunpack.c.0.s8 %v867
    %v869 = vperm.slane %v864, %v868
    %871 = vset.pattern.permute.xlu0 0
    %872 = vperm.xlu0 %871, %v92
    %v873 = vpop.permute.xlu0 %872
    %v876 = vunpack.c.l.s4 839922192
    %v877 = vunpack.c.0.s8 %v876
    %v878 = vperm.slane %v873, %v877
    %880 = vset.pattern.permute.xlu0 0
    %881 = vperm.xlu0 %880, %v93
    %v882 = vpop.permute.xlu0 %881
    %v885 = vunpack.c.l.s4 839922192
    %v886 = vunpack.c.0.s8 %v885
    %v887 = vperm.slane %v882, %v886
    %v888 = vunpack.c.l.bf16 %v784
    %v889 = vunpack.c.h.bf16 %v784
    %v890 = vunpack.c.l.bf16 %v785
    %v891 = vunpack.c.h.bf16 %v785
    %v892 = vunpack.c.l.bf16 %v786
    %v893 = vunpack.c.h.bf16 %v786
    %v894 = vunpack.c.l.bf16 %v787
    %v895 = vunpack.c.h.bf16 %v787
    %v896 = vunpack.c.l.bf16 %v788
    %v897 = vunpack.c.h.bf16 %v788
    %v898 = vunpack.c.l.bf16 %v789
    %v899 = vunpack.c.h.bf16 %v789
    %v900 = vunpack.c.l.bf16 %v790
    %v901 = vunpack.c.h.bf16 %v790
    %v902 = vunpack.c.l.bf16 %v791
    %v903 = vunpack.c.h.bf16 %v791
    %v904 = vunpack.c.l.bf16 %v792
    %v905 = vunpack.c.h.bf16 %v792
    %v906 = vunpack.c.l.bf16 %v793
    %v907 = vunpack.c.h.bf16 %v793
    %v908 = vunpack.c.l.bf16 %v794
    %v909 = vunpack.c.h.bf16 %v794
    %v910 = vunpack.c.l.bf16 %v795
    %v911 = vunpack.c.h.bf16 %v795
    %v912 = vunpack.c.l.bf16 %v796
    %v913 = vunpack.c.h.bf16 %v796
    %v914 = vunpack.c.l.bf16 %v797
    %v915 = vunpack.c.h.bf16 %v797
    %v916 = vunpack.c.l.bf16 %v798
    %v917 = vunpack.c.h.bf16 %v798
    %v918 = vunpack.c.l.bf16 %v799
    %v919 = vunpack.c.h.bf16 %v799
    %v920 = vunpack.c.l.bf16 %v800
    %v921 = vunpack.c.h.bf16 %v800
    %v922 = vunpack.c.l.bf16 %v801
    %v923 = vunpack.c.h.bf16 %v801
    %v924 = vunpack.c.l.bf16 %v802
    %v925 = vunpack.c.h.bf16 %v802
    %v926 = vunpack.c.l.bf16 %v803
    %v927 = vunpack.c.h.bf16 %v803
    %v928 = vunpack.c.l.bf16 %v804
    %v929 = vunpack.c.h.bf16 %v804
    %v930 = vunpack.c.l.bf16 %v805
    %v931 = vunpack.c.h.bf16 %v805
    %v932 = vunpack.c.l.bf16 %v806
    %v933 = vunpack.c.h.bf16 %v806
    %v934 = vunpack.c.l.bf16 %v807
    %v935 = vunpack.c.h.bf16 %v807
    %v936 = vunpack.c.l.bf16 %v808
    %v937 = vunpack.c.h.bf16 %v808
    %v938 = vunpack.c.l.bf16 %v809
    %v939 = vunpack.c.h.bf16 %v809
    %v940 = vunpack.c.l.bf16 %v810
    %v941 = vunpack.c.h.bf16 %v810
    %v942 = vunpack.c.l.bf16 %v811
    %v943 = vunpack.c.h.bf16 %v811
    %v944 = vunpack.c.l.bf16 %v812
    %v945 = vunpack.c.h.bf16 %v812
    %v946 = vunpack.c.l.bf16 %v813
    %v947 = vunpack.c.h.bf16 %v813
    %v948 = vunpack.c.l.bf16 %v814
    %v949 = vunpack.c.h.bf16 %v814
    %v950 = vunpack.c.l.bf16 %v815
    %v951 = vunpack.c.h.bf16 %v815
    %v952 = vunpack.c.l.bf16 %v824
    %v953 = vunpack.c.l.bf16 %v833
    %v954 = vunpack.c.l.bf16 %v842
    %v955 = vunpack.c.l.bf16 %v851
    %v956 = vunpack.c.l.bf16 %v860
    %v957 = vunpack.c.l.bf16 %v869
    %v958 = vunpack.c.l.bf16 %v878
    %v959 = vunpack.c.l.bf16 %v887
    %v960 = vadd.f32 %v888, %v952
    %v961 = vadd.f32 %v889, %v952
    %v962 = vadd.f32 %v890, %v952
    %v963 = vadd.f32 %v891, %v952
    %v964 = vadd.f32 %v892, %v952
    %v965 = vadd.f32 %v893, %v952
    %v966 = vadd.f32 %v894, %v952
    %v967 = vadd.f32 %v895, %v952
    %v968 = vadd.f32 %v896, %v953
    %v969 = vadd.f32 %v897, %v953
    %v970 = vadd.f32 %v898, %v953
    %v971 = vadd.f32 %v899, %v953
    %v972 = vadd.f32 %v900, %v953
    %v973 = vadd.f32 %v901, %v953
    %v974 = vadd.f32 %v902, %v953
    %v975 = vadd.f32 %v903, %v953
    %v976 = vadd.f32 %v904, %v954
    %v977 = vadd.f32 %v905, %v954
    %v978 = vadd.f32 %v906, %v954
    %v979 = vadd.f32 %v907, %v954
    %v980 = vadd.f32 %v908, %v954
    %v981 = vadd.f32 %v909, %v954
    %v982 = vadd.f32 %v910, %v954
    %v983 = vadd.f32 %v911, %v954
    %v984 = vadd.f32 %v912, %v955
    %v985 = vadd.f32 %v913, %v955
    %v986 = vadd.f32 %v914, %v955
    %v987 = vadd.f32 %v915, %v955
    %v988 = vadd.f32 %v916, %v955
    %v989 = vadd.f32 %v917, %v955
    %v990 = vadd.f32 %v918, %v955
    %v991 = vadd.f32 %v919, %v955
    %v992 = vadd.f32 %v920, %v956
    %v993 = vadd.f32 %v921, %v956
    %v994 = vadd.f32 %v922, %v956
    %v995 = vadd.f32 %v923, %v956
    %v996 = vadd.f32 %v924, %v956
    %v997 = vadd.f32 %v925, %v956
    %v998 = vadd.f32 %v926, %v956
    %v999 = vadd.f32 %v927, %v956
    %v1000 = vadd.f32 %v928, %v957
    %v1001 = vadd.f32 %v929, %v957
    %v1002 = vadd.f32 %v930, %v957
    %v1003 = vadd.f32 %v931, %v957
    %v1004 = vadd.f32 %v932, %v957
    %v1005 = vadd.f32 %v933, %v957
    %v1006 = vadd.f32 %v934, %v957
    %v1007 = vadd.f32 %v935, %v957
    %v1008 = vadd.f32 %v936, %v958
    %v1009 = vadd.f32 %v937, %v958
    %v1010 = vadd.f32 %v938, %v958
    %v1011 = vadd.f32 %v939, %v958
    %v1012 = vadd.f32 %v940, %v958
    %v1013 = vadd.f32 %v941, %v958
    %v1014 = vadd.f32 %v942, %v958
    %v1015 = vadd.f32 %v943, %v958
    %v1016 = vadd.f32 %v944, %v959
    %v1017 = vadd.f32 %v945, %v959
    %v1018 = vadd.f32 %v946, %v959
    %v1019 = vadd.f32 %v947, %v959
    %v1020 = vadd.f32 %v948, %v959
    %v1021 = vadd.f32 %v949, %v959
    %v1022 = vadd.f32 %v950, %v959
    %v1023 = vadd.f32 %v951, %v959
    %v1024 = vpack.c.bf16 %v961, %v960
    %v1025 = vpack.c.bf16 %v963, %v962
    %v1026 = vpack.c.bf16 %v965, %v964
    %v1027 = vpack.c.bf16 %v967, %v966
    %v1028 = vpack.c.bf16 %v969, %v968
    %v1029 = vpack.c.bf16 %v971, %v970
    %v1030 = vpack.c.bf16 %v973, %v972
    %v1031 = vpack.c.bf16 %v975, %v974
    %v1032 = vpack.c.bf16 %v977, %v976
    %v1033 = vpack.c.bf16 %v979, %v978
    %v1034 = vpack.c.bf16 %v981, %v980
    %v1035 = vpack.c.bf16 %v983, %v982
    %v1036 = vpack.c.bf16 %v985, %v984
    %v1037 = vpack.c.bf16 %v987, %v986
    %v1038 = vpack.c.bf16 %v989, %v988
    %v1039 = vpack.c.bf16 %v991, %v990
    %v1040 = vpack.c.bf16 %v993, %v992
    %v1041 = vpack.c.bf16 %v995, %v994
    %v1042 = vpack.c.bf16 %v997, %v996
    %v1043 = vpack.c.bf16 %v999, %v998
    %v1044 = vpack.c.bf16 %v1001, %v1000
    %v1045 = vpack.c.bf16 %v1003, %v1002
    %v1046 = vpack.c.bf16 %v1005, %v1004
    %v1047 = vpack.c.bf16 %v1007, %v1006
    %v1048 = vpack.c.bf16 %v1009, %v1008
    %v1049 = vpack.c.bf16 %v1011, %v1010
    %v1050 = vpack.c.bf16 %v1013, %v1012
    %v1051 = vpack.c.bf16 %v1015, %v1014
    %v1052 = vpack.c.bf16 %v1017, %v1016
    %v1053 = vpack.c.bf16 %v1019, %v1018
    %v1054 = vpack.c.bf16 %v1021, %v1020
    %v1055 = vpack.c.bf16 %v1023, %v1022
    %v1056 = vunpack.c.l.bf16 %v1024
    %v1057 = vunpack.c.h.bf16 %v1024
    %v1058 = vunpack.c.l.bf16 %v1025
    %v1059 = vunpack.c.h.bf16 %v1025
    %v1060 = vunpack.c.l.bf16 %v1026
    %v1061 = vunpack.c.h.bf16 %v1026
    %v1062 = vunpack.c.l.bf16 %v1027
    %v1063 = vunpack.c.h.bf16 %v1027
    %v1064 = vunpack.c.l.bf16 %v1028
    %v1065 = vunpack.c.h.bf16 %v1028
    %v1066 = vunpack.c.l.bf16 %v1029
    %v1067 = vunpack.c.h.bf16 %v1029
    %v1068 = vunpack.c.l.bf16 %v1030
    %v1069 = vunpack.c.h.bf16 %v1030
    %v1070 = vunpack.c.l.bf16 %v1031
    %v1071 = vunpack.c.h.bf16 %v1031
    %v1072 = vunpack.c.l.bf16 %v1032
    %v1073 = vunpack.c.h.bf16 %v1032
    %v1074 = vunpack.c.l.bf16 %v1033
    %v1075 = vunpack.c.h.bf16 %v1033
    %v1076 = vunpack.c.l.bf16 %v1034
    %v1077 = vunpack.c.h.bf16 %v1034
    %v1078 = vunpack.c.l.bf16 %v1035
    %v1079 = vunpack.c.h.bf16 %v1035
    %v1080 = vunpack.c.l.bf16 %v1036
    %v1081 = vunpack.c.h.bf16 %v1036
    %v1082 = vunpack.c.l.bf16 %v1037
    %v1083 = vunpack.c.h.bf16 %v1037
    %v1084 = vunpack.c.l.bf16 %v1038
    %v1085 = vunpack.c.h.bf16 %v1038
    %v1086 = vunpack.c.l.bf16 %v1039
    %v1087 = vunpack.c.h.bf16 %v1039
    %v1088 = vunpack.c.l.bf16 %v1040
    %v1089 = vunpack.c.h.bf16 %v1040
    %v1090 = vunpack.c.l.bf16 %v1041
    %v1091 = vunpack.c.h.bf16 %v1041
    %v1092 = vunpack.c.l.bf16 %v1042
    %v1093 = vunpack.c.h.bf16 %v1042
    %v1094 = vunpack.c.l.bf16 %v1043
    %v1095 = vunpack.c.h.bf16 %v1043
    %v1096 = vunpack.c.l.bf16 %v1044
    %v1097 = vunpack.c.h.bf16 %v1044
    %v1098 = vunpack.c.l.bf16 %v1045
    %v1099 = vunpack.c.h.bf16 %v1045
    %v1100 = vunpack.c.l.bf16 %v1046
    %v1101 = vunpack.c.h.bf16 %v1046
    %v1102 = vunpack.c.l.bf16 %v1047
    %v1103 = vunpack.c.h.bf16 %v1047
    %v1104 = vunpack.c.l.bf16 %v1048
    %v1105 = vunpack.c.h.bf16 %v1048
    %v1106 = vunpack.c.l.bf16 %v1049
    %v1107 = vunpack.c.h.bf16 %v1049
    %v1108 = vunpack.c.l.bf16 %v1050
    %v1109 = vunpack.c.h.bf16 %v1050
    %v1110 = vunpack.c.l.bf16 %v1051
    %v1111 = vunpack.c.h.bf16 %v1051
    %v1112 = vunpack.c.l.bf16 %v1052
    %v1113 = vunpack.c.h.bf16 %v1052
    %v1114 = vunpack.c.l.bf16 %v1053
    %v1115 = vunpack.c.h.bf16 %v1053
    %v1116 = vunpack.c.l.bf16 %v1054
    %v1117 = vunpack.c.h.bf16 %v1054
    %v1118 = vunpack.c.l.bf16 %v1055
    %v1119 = vunpack.c.h.bf16 %v1055
    %v1120 = vmax.f32 %v1056, 0.0
    %v1121 = vmax.f32 %v1057, 0.0
    %v1122 = vmax.f32 %v1058, 0.0
    %v1123 = vmax.f32 %v1059, 0.0
    %v1124 = vmax.f32 %v1060, 0.0
    %v1125 = vmax.f32 %v1061, 0.0
    %v1126 = vmax.f32 %v1062, 0.0
    %v1127 = vmax.f32 %v1063, 0.0
    %v1128 = vmax.f32 %v1064, 0.0
    %v1129 = vmax.f32 %v1065, 0.0
    %v1130 = vmax.f32 %v1066, 0.0
    %v1131 = vmax.f32 %v1067, 0.0
    %v1132 = vmax.f32 %v1068, 0.0
    %v1133 = vmax.f32 %v1069, 0.0
    %v1134 = vmax.f32 %v1070, 0.0
    %v1135 = vmax.f32 %v1071, 0.0
    %v1136 = vmax.f32 %v1072, 0.0
    %v1137 = vmax.f32 %v1073, 0.0
    %v1138 = vmax.f32 %v1074, 0.0
    %v1139 = vmax.f32 %v1075, 0.0
    %v1140 = vmax.f32 %v1076, 0.0
    %v1141 = vmax.f32 %v1077, 0.0
    %v1142 = vmax.f32 %v1078, 0.0
    %v1143 = vmax.f32 %v1079, 0.0
    %v1144 = vmax.f32 %v1080, 0.0
    %v1145 = vmax.f32 %v1081, 0.0
    %v1146 = vmax.f32 %v1082, 0.0
    %v1147 = vmax.f32 %v1083, 0.0
    %v1148 = vmax.f32 %v1084, 0.0
    %v1149 = vmax.f32 %v1085, 0.0
    %v1150 = vmax.f32 %v1086, 0.0
    %v1151 = vmax.f32 %v1087, 0.0
    %v1152 = vmax.f32 %v1088, 0.0
    %v1153 = vmax.f32 %v1089, 0.0
    %v1154 = vmax.f32 %v1090, 0.0
    %v1155 = vmax.f32 %v1091, 0.0
    %v1156 = vmax.f32 %v1092, 0.0
    %v1157 = vmax.f32 %v1093, 0.0
    %v1158 = vmax.f32 %v1094, 0.0
    %v1159 = vmax.f32 %v1095, 0.0
    %v1160 = vmax.f32 %v1096, 0.0
    %v1161 = vmax.f32 %v1097, 0.0
    %v1162 = vmax.f32 %v1098, 0.0
    %v1163 = vmax.f32 %v1099, 0.0
    %v1164 = vmax.f32 %v1100, 0.0
    %v1165 = vmax.f32 %v1101, 0.0
    %v1166 = vmax.f32 %v1102, 0.0
    %v1167 = vmax.f32 %v1103, 0.0
    %v1168 = vmax.f32 %v1104, 0.0
    %v1169 = vmax.f32 %v1105, 0.0
    %v1170 = vmax.f32 %v1106, 0.0
    %v1171 = vmax.f32 %v1107, 0.0
    %v1172 = vmax.f32 %v1108, 0.0
    %v1173 = vmax.f32 %v1109, 0.0
    %v1174 = vmax.f32 %v1110, 0.0
    %v1175 = vmax.f32 %v1111, 0.0
    %v1176 = vmax.f32 %v1112, 0.0
    %v1177 = vmax.f32 %v1113, 0.0
    %v1178 = vmax.f32 %v1114, 0.0
    %v1179 = vmax.f32 %v1115, 0.0
    %v1180 = vmax.f32 %v1116, 0.0
    %v1181 = vmax.f32 %v1117, 0.0
    %v1182 = vmax.f32 %v1118, 0.0
    %v1183 = vmax.f32 %v1119, 0.0
    %v1184 = vpack.c.bf16 %v1128, %v1120
    %v1185 = vpack.c.bf16 %v1129, %v1121
    %v1186 = vpack.c.bf16 %v1130, %v1122
    %v1187 = vpack.c.bf16 %v1131, %v1123
    %v1188 = vpack.c.bf16 %v1132, %v1124
    %v1189 = vpack.c.bf16 %v1133, %v1125
    %v1190 = vpack.c.bf16 %v1134, %v1126
    %v1191 = vpack.c.bf16 %v1135, %v1127
    %v1192 = vpack.c.bf16 %v1144, %v1136
    %v1193 = vpack.c.bf16 %v1145, %v1137
    %v1194 = vpack.c.bf16 %v1146, %v1138
    %v1195 = vpack.c.bf16 %v1147, %v1139
    %v1196 = vpack.c.bf16 %v1148, %v1140
    %v1197 = vpack.c.bf16 %v1149, %v1141
    %v1198 = vpack.c.bf16 %v1150, %v1142
    %v1199 = vpack.c.bf16 %v1151, %v1143
    %v1200 = vpack.c.bf16 %v1160, %v1152
    %v1201 = vpack.c.bf16 %v1161, %v1153
    %v1202 = vpack.c.bf16 %v1162, %v1154
    %v1203 = vpack.c.bf16 %v1163, %v1155
    %v1204 = vpack.c.bf16 %v1164, %v1156
    %v1205 = vpack.c.bf16 %v1165, %v1157
    %v1206 = vpack.c.bf16 %v1166, %v1158
    %v1207 = vpack.c.bf16 %v1167, %v1159
    %v1208 = vpack.c.bf16 %v1176, %v1168
    %v1209 = vpack.c.bf16 %v1177, %v1169
    %v1210 = vpack.c.bf16 %v1178, %v1170
    %v1211 = vpack.c.bf16 %v1179, %v1171
    %v1212 = vpack.c.bf16 %v1180, %v1172
    %v1213 = vpack.c.bf16 %v1181, %v1173
    %v1214 = vpack.c.bf16 %v1182, %v1174
    %v1215 = vpack.c.bf16 %v1183, %v1175
    %1217 = vset.pattern.permute.xlu0 0
    %1218 = vperm.xlu0 %1217, %v94
    %v1219 = vpop.permute.xlu0 %1218
    %1222 = vset.pattern.permute.xlu0 0
    %1223 = vperm.xlu0 %1222, %v95
    %v1224 = vpop.permute.xlu0 %1223
    %1227 = vset.pattern.permute.xlu0 0
    %1228 = vperm.xlu0 %1227, %v96
    %v1229 = vpop.permute.xlu0 %1228
    %1232 = vset.pattern.permute.xlu0 0
    %1233 = vperm.xlu0 %1232, %v97
    %v1234 = vpop.permute.xlu0 %1233
    %1237 = vset.pattern.permute.xlu0 0
    %1238 = vperm.xlu0 %1237, %v98
    %v1239 = vpop.permute.xlu0 %1238
    %1242 = vset.pattern.permute.xlu0 0
    %1243 = vperm.xlu0 %1242, %v99
    %v1244 = vpop.permute.xlu0 %1243
    %1247 = vset.pattern.permute.xlu0 0
    %1248 = vperm.xlu0 %1247, %v100
    %v1249 = vpop.permute.xlu0 %1248
    %1252 = vset.pattern.permute.xlu0 0
    %1253 = vperm.xlu0 %1252, %v101
    %v1254 = vpop.permute.xlu0 %1253
    %v1264 = vunpack.c.l.b16 %v74
    %v1265 = vunpack.c.l.b16 %v75
    %v1266 = vunpack.c.l.b16 %v76
    %v1267 = vunpack.c.l.b16 %v77
    %v1268 = vunpack.c.l.b16 %v78
    %v1269 = vunpack.c.l.b16 %v79
    %v1270 = vunpack.c.l.b16 %v80
    %v1271 = vunpack.c.l.b16 %v81
    %v1272 = vpack.c.b16 %v1265, %v1264
    %v1273 = vpack.c.b16 %v1267, %v1266
    %v1274 = vpack.c.b16 %v1269, %v1268
    %v1275 = vpack.c.b16 %v1271, %v1270
    %vm1276 = vcmask 523264
    %v1278 = vsel %vm1276, %v1272, 0
    %v1281 = vsel %vm1276, %v1273, 0
    %v1284 = vsel %vm1276, %v1274, 0
    %v1287 = vsel %vm1276, %v1275, 0
    %1289 = vmatpush.bf16.msra.mxu0 0
    %1290 = vmatpush.bf16.msra.mxu0 0
    %1291 = vmatpush.bf16.msra.mxu0 0
    %1292 = vmatpush.bf16.msra.mxu0 0
    %1293 = vmatpush.bf16.msra.mxu0 %v1208
    %1294 = vmatpush.bf16.msra.mxu0 %v1200
    %1295 = vmatpush.bf16.msra.mxu0 %v1192
    %1296 = vmatpush.bf16.msra.mxu0 %v1184
    %1297 = vmatmul.bf16.gmra.mxu0 %v1278
    %v1298 = vpop.f32.mrf.mxu0
    %v1299 = vadd.f32 %v1219, %v1298
    %v1300 = vpop.f32.mrf.mxu0
    %v1301 = vadd.f32 %v1224, %v1300
    %1302 = vmatmul.bf16.gmra.mxu0 %v1281
    %v1303 = vpop.f32.mrf.mxu0
    %v1304 = vadd.f32 %v1229, %v1303
    %v1305 = vpop.f32.mrf.mxu0
    %v1306 = vadd.f32 %v1234, %v1305
    %1307 = vmatmul.bf16.gmra.mxu0 %v1284
    %v1308 = vpop.f32.mrf.mxu0
    %v1309 = vadd.f32 %v1239, %v1308
    %v1310 = vpop.f32.mrf.mxu0
    %v1311 = vadd.f32 %v1244, %v1310
    %1312 = vmatmul.bf16.gmra.mxu0 %v1287
    %v1313 = vpop.f32.mrf.mxu0
    %v1314 = vadd.f32 %v1249, %v1313
    %v1315 = vpop.f32.mrf.mxu0
    %v1316 = vadd.f32 %v1254, %v1315
    %1317 = vdwg.mxu0
    %1318 = vmatpush.bf16.msra.mxu0 0
    %1319 = vmatpush.bf16.msra.mxu0 0
    %1320 = vmatpush.bf16.msra.mxu0 0
    %1321 = vmatpush.bf16.msra.mxu0 0
    %1322 = vmatpush.bf16.msra.mxu0 %v1209
    %1323 = vmatpush.bf16.msra.mxu0 %v1201
    %1324 = vmatpush.bf16.msra.mxu0 %v1193
    %1325 = vmatpush.bf16.msra.mxu0 %v1185
    %1326 = vmatmul.bf16.gmra.mxu0 %v1278
    %v1327 = vpop.f32.mrf.mxu0
    %v1328 = vadd.f32 %v1219, %v1327
    %v1329 = vpop.f32.mrf.mxu0
    %v1330 = vadd.f32 %v1224, %v1329
    %1331 = vmatmul.bf16.gmra.mxu0 %v1281
    %v1332 = vpop.f32.mrf.mxu0
    %v1333 = vadd.f32 %v1229, %v1332
    %v1334 = vpop.f32.mrf.mxu0
    %v1335 = vadd.f32 %v1234, %v1334
    %1336 = vmatmul.bf16.gmra.mxu0 %v1284
    %v1337 = vpop.f32.mrf.mxu0
    %v1338 = vadd.f32 %v1239, %v1337
    %v1339 = vpop.f32.mrf.mxu0
    %v1340 = vadd.f32 %v1244, %v1339
    %1341 = vmatmul.bf16.gmra.mxu0 %v1287
    %v1342 = vpop.f32.mrf.mxu0
    %v1343 = vadd.f32 %v1249, %v1342
    %v1344 = vpop.f32.mrf.mxu0
    %v1345 = vadd.f32 %v1254, %v1344
    %1346 = vdwg.mxu0
    %1347 = vmatpush.bf16.msra.mxu0 0
    %1348 = vmatpush.bf16.msra.mxu0 0
    %1349 = vmatpush.bf16.msra.mxu0 0
    %1350 = vmatpush.bf16.msra.mxu0 0
    %1351 = vmatpush.bf16.msra.mxu0 %v1210
    %1352 = vmatpush.bf16.msra.mxu0 %v1202
    %1353 = vmatpush.bf16.msra.mxu0 %v1194
    %1354 = vmatpush.bf16.msra.mxu0 %v1186
    %1355 = vmatmul.bf16.gmra.mxu0 %v1278
    %v1356 = vpop.f32.mrf.mxu0
    %v1357 = vadd.f32 %v1219, %v1356
    %v1358 = vpop.f32.mrf.mxu0
    %v1359 = vadd.f32 %v1224, %v1358
    %1360 = vmatmul.bf16.gmra.mxu0 %v1281
    %v1361 = vpop.f32.mrf.mxu0
    %v1362 = vadd.f32 %v1229, %v1361
    %v1363 = vpop.f32.mrf.mxu0
    %v1364 = vadd.f32 %v1234, %v1363
    %1365 = vmatmul.bf16.gmra.mxu0 %v1284
    %v1366 = vpop.f32.mrf.mxu0
    %v1367 = vadd.f32 %v1239, %v1366
    %v1368 = vpop.f32.mrf.mxu0
    %v1369 = vadd.f32 %v1244, %v1368
    %1370 = vmatmul.bf16.gmra.mxu0 %v1287
    %v1371 = vpop.f32.mrf.mxu0
    %v1372 = vadd.f32 %v1249, %v1371
    %v1373 = vpop.f32.mrf.mxu0
    %v1374 = vadd.f32 %v1254, %v1373
    %1375 = vdwg.mxu0
    %1376 = vmatpush.bf16.msra.mxu0 0
    %1377 = vmatpush.bf16.msra.mxu0 0
    %1378 = vmatpush.bf16.msra.mxu0 0
    %1379 = vmatpush.bf16.msra.mxu0 0
    %1380 = vmatpush.bf16.msra.mxu0 %v1211
    %1381 = vmatpush.bf16.msra.mxu0 %v1203
    %1382 = vmatpush.bf16.msra.mxu0 %v1195
    %1383 = vmatpush.bf16.msra.mxu0 %v1187
    %1384 = vmatmul.bf16.gmra.mxu0 %v1278
    %v1385 = vpop.f32.mrf.mxu0
    %v1386 = vadd.f32 %v1219, %v1385
    %v1387 = vpop.f32.mrf.mxu0
    %v1388 = vadd.f32 %v1224, %v1387
    %1389 = vmatmul.bf16.gmra.mxu0 %v1281
    %v1390 = vpop.f32.mrf.mxu0
    %v1391 = vadd.f32 %v1229, %v1390
    %v1392 = vpop.f32.mrf.mxu0
    %v1393 = vadd.f32 %v1234, %v1392
    %1394 = vmatmul.bf16.gmra.mxu0 %v1284
    %v1395 = vpop.f32.mrf.mxu0
    %v1396 = vadd.f32 %v1239, %v1395
    %v1397 = vpop.f32.mrf.mxu0
    %v1398 = vadd.f32 %v1244, %v1397
    %1399 = vmatmul.bf16.gmra.mxu0 %v1287
    %v1400 = vpop.f32.mrf.mxu0
    %v1401 = vadd.f32 %v1249, %v1400
    %v1402 = vpop.f32.mrf.mxu0
    %v1403 = vadd.f32 %v1254, %v1402
    %1404 = vdwg.mxu0
    %1405 = vmatpush.bf16.msra.mxu0 0
    %1406 = vmatpush.bf16.msra.mxu0 0
    %1407 = vmatpush.bf16.msra.mxu0 0
    %1408 = vmatpush.bf16.msra.mxu0 0
    %1409 = vmatpush.bf16.msra.mxu0 %v1212
    %1410 = vmatpush.bf16.msra.mxu0 %v1204
    %1411 = vmatpush.bf16.msra.mxu0 %v1196
    %1412 = vmatpush.bf16.msra.mxu0 %v1188
    %1413 = vmatmul.bf16.gmra.mxu0 %v1278
    %v1414 = vpop.f32.mrf.mxu0
    %v1415 = vadd.f32 %v1219, %v1414
    %v1416 = vpop.f32.mrf.mxu0
    %v1417 = vadd.f32 %v1224, %v1416
    %1418 = vmatmul.bf16.gmra.mxu0 %v1281
    %v1419 = vpop.f32.mrf.mxu0
    %v1420 = vadd.f32 %v1229, %v1419
    %v1421 = vpop.f32.mrf.mxu0
    %v1422 = vadd.f32 %v1234, %v1421
    %1423 = vmatmul.bf16.gmra.mxu0 %v1284
    %v1424 = vpop.f32.mrf.mxu0
    %v1425 = vadd.f32 %v1239, %v1424
    %v1426 = vpop.f32.mrf.mxu0
    %v1427 = vadd.f32 %v1244, %v1426
    %1428 = vmatmul.bf16.gmra.mxu0 %v1287
    %v1429 = vpop.f32.mrf.mxu0
    %v1430 = vadd.f32 %v1249, %v1429
    %v1431 = vpop.f32.mrf.mxu0
    %v1432 = vadd.f32 %v1254, %v1431
    %1433 = vdwg.mxu0
    %1434 = vmatpush.bf16.msra.mxu0 0
    %1435 = vmatpush.bf16.msra.mxu0 0
    %1436 = vmatpush.bf16.msra.mxu0 0
    %1437 = vmatpush.bf16.msra.mxu0 0
    %1438 = vmatpush.bf16.msra.mxu0 %v1213
    %1439 = vmatpush.bf16.msra.mxu0 %v1205
    %1440 = vmatpush.bf16.msra.mxu0 %v1197
    %1441 = vmatpush.bf16.msra.mxu0 %v1189
    %1442 = vmatmul.bf16.gmra.mxu0 %v1278
    %v1443 = vpop.f32.mrf.mxu0
    %v1444 = vadd.f32 %v1219, %v1443
    %v1445 = vpop.f32.mrf.mxu0
    %v1446 = vadd.f32 %v1224, %v1445
    %1447 = vmatmul.bf16.gmra.mxu0 %v1281
    %v1448 = vpop.f32.mrf.mxu0
    %v1449 = vadd.f32 %v1229, %v1448
    %v1450 = vpop.f32.mrf.mxu0
    %v1451 = vadd.f32 %v1234, %v1450
    %1452 = vmatmul.bf16.gmra.mxu0 %v1284
    %v1453 = vpop.f32.mrf.mxu0
    %v1454 = vadd.f32 %v1239, %v1453
    %v1455 = vpop.f32.mrf.mxu0
    %v1456 = vadd.f32 %v1244, %v1455
    %1457 = vmatmul.bf16.gmra.mxu0 %v1287
    %v1458 = vpop.f32.mrf.mxu0
    %v1459 = vadd.f32 %v1249, %v1458
    %v1460 = vpop.f32.mrf.mxu0
    %v1461 = vadd.f32 %v1254, %v1460
    %1462 = vdwg.mxu0
    %1463 = vmatpush.bf16.msra.mxu0 0
    %1464 = vmatpush.bf16.msra.mxu0 0
    %1465 = vmatpush.bf16.msra.mxu0 0
    %1466 = vmatpush.bf16.msra.mxu0 0
    %1467 = vmatpush.bf16.msra.mxu0 %v1214
    %1468 = vmatpush.bf16.msra.mxu0 %v1206
    %1469 = vmatpush.bf16.msra.mxu0 %v1198
    %1470 = vmatpush.bf16.msra.mxu0 %v1190
    %1471 = vmatmul.bf16.gmra.mxu0 %v1278
    %v1472 = vpop.f32.mrf.mxu0
    %v1473 = vadd.f32 %v1219, %v1472
    %v1474 = vpop.f32.mrf.mxu0
    %v1475 = vadd.f32 %v1224, %v1474
    %1476 = vmatmul.bf16.gmra.mxu0 %v1281
    %v1477 = vpop.f32.mrf.mxu0
    %v1478 = vadd.f32 %v1229, %v1477
    %v1479 = vpop.f32.mrf.mxu0
    %v1480 = vadd.f32 %v1234, %v1479
    %1481 = vmatmul.bf16.gmra.mxu0 %v1284
    %v1482 = vpop.f32.mrf.mxu0
    %v1483 = vadd.f32 %v1239, %v1482
    %v1484 = vpop.f32.mrf.mxu0
    %v1485 = vadd.f32 %v1244, %v1484
    %1486 = vmatmul.bf16.gmra.mxu0 %v1287
    %v1487 = vpop.f32.mrf.mxu0
    %v1488 = vadd.f32 %v1249, %v1487
    %v1489 = vpop.f32.mrf.mxu0
    %v1490 = vadd.f32 %v1254, %v1489
    %1491 = vdwg.mxu0
    %1492 = vmatpush.bf16.msra.mxu0 0
    %1493 = vmatpush.bf16.msra.mxu0 0
    %1494 = vmatpush.bf16.msra.mxu0 0
    %1495 = vmatpush.bf16.msra.mxu0 0
    %1496 = vmatpush.bf16.msra.mxu0 %v1215
    %1497 = vmatpush.bf16.msra.mxu0 %v1207
    %1498 = vmatpush.bf16.msra.mxu0 %v1199
    %1499 = vmatpush.bf16.msra.mxu0 %v1191
    %1500 = vmatmul.bf16.gmra.mxu0 %v1278
    %v1501 = vpop.f32.mrf.mxu0
    %v1502 = vadd.f32 %v1219, %v1501
    %v1503 = vpop.f32.mrf.mxu0
    %v1504 = vadd.f32 %v1224, %v1503
    %1505 = vmatmul.bf16.gmra.mxu0 %v1281
    %v1506 = vpop.f32.mrf.mxu0
    %v1507 = vadd.f32 %v1229, %v1506
    %v1508 = vpop.f32.mrf.mxu0
    %v1509 = vadd.f32 %v1234, %v1508
    %1510 = vmatmul.bf16.gmra.mxu0 %v1284
    %v1511 = vpop.f32.mrf.mxu0
    %v1512 = vadd.f32 %v1239, %v1511
    %v1513 = vpop.f32.mrf.mxu0
    %v1514 = vadd.f32 %v1244, %v1513
    %1515 = vmatmul.bf16.gmra.mxu0 %v1287
    %v1516 = vpop.f32.mrf.mxu0
    %v1517 = vadd.f32 %v1249, %v1516
    %v1518 = vpop.f32.mrf.mxu0
    %v1519 = vadd.f32 %v1254, %v1518
    %1520 = vdwg.mxu0
    %v1521 = vmax.f32 %v1299, 0.0
    %v1522 = vmax.f32 %v1328, 0.0
    %v1523 = vmax.f32 %v1357, 0.0
    %v1524 = vmax.f32 %v1386, 0.0
    %v1525 = vmax.f32 %v1415, 0.0
    %v1526 = vmax.f32 %v1444, 0.0
    %v1527 = vmax.f32 %v1473, 0.0
    %v1528 = vmax.f32 %v1502, 0.0
    %v1529 = vmax.f32 %v1301, 0.0
    %v1530 = vmax.f32 %v1330, 0.0
    %v1531 = vmax.f32 %v1359, 0.0
    %v1532 = vmax.f32 %v1388, 0.0
    %v1533 = vmax.f32 %v1417, 0.0
    %v1534 = vmax.f32 %v1446, 0.0
    %v1535 = vmax.f32 %v1475, 0.0
    %v1536 = vmax.f32 %v1504, 0.0
    %v1537 = vmax.f32 %v1304, 0.0
    %v1538 = vmax.f32 %v1333, 0.0
    %v1539 = vmax.f32 %v1362, 0.0
    %v1540 = vmax.f32 %v1391, 0.0
    %v1541 = vmax.f32 %v1420, 0.0
    %v1542 = vmax.f32 %v1449, 0.0
    %v1543 = vmax.f32 %v1478, 0.0
    %v1544 = vmax.f32 %v1507, 0.0
    %v1545 = vmax.f32 %v1306, 0.0
    %v1546 = vmax.f32 %v1335, 0.0
    %v1547 = vmax.f32 %v1364, 0.0
    %v1548 = vmax.f32 %v1393, 0.0
    %v1549 = vmax.f32 %v1422, 0.0
    %v1550 = vmax.f32 %v1451, 0.0
    %v1551 = vmax.f32 %v1480, 0.0
    %v1552 = vmax.f32 %v1509, 0.0
    %v1553 = vmax.f32 %v1309, 0.0
    %v1554 = vmax.f32 %v1338, 0.0
    %v1555 = vmax.f32 %v1367, 0.0
    %v1556 = vmax.f32 %v1396, 0.0
    %v1557 = vmax.f32 %v1425, 0.0
    %v1558 = vmax.f32 %v1454, 0.0
    %v1559 = vmax.f32 %v1483, 0.0
    %v1560 = vmax.f32 %v1512, 0.0
    %v1561 = vmax.f32 %v1311, 0.0
    %v1562 = vmax.f32 %v1340, 0.0
    %v1563 = vmax.f32 %v1369, 0.0
    %v1564 = vmax.f32 %v1398, 0.0
    %v1565 = vmax.f32 %v1427, 0.0
    %v1566 = vmax.f32 %v1456, 0.0
    %v1567 = vmax.f32 %v1485, 0.0
    %v1568 = vmax.f32 %v1514, 0.0
    %v1569 = vmax.f32 %v1314, 0.0
    %v1570 = vmax.f32 %v1343, 0.0
    %v1571 = vmax.f32 %v1372, 0.0
    %v1572 = vmax.f32 %v1401, 0.0
    %v1573 = vmax.f32 %v1430, 0.0
    %v1574 = vmax.f32 %v1459, 0.0
    %v1575 = vmax.f32 %v1488, 0.0
    %v1576 = vmax.f32 %v1517, 0.0
    %v1577 = vmax.f32 %v1316, 0.0
    %v1578 = vmax.f32 %v1345, 0.0
    %v1579 = vmax.f32 %v1374, 0.0
    %v1580 = vmax.f32 %v1403, 0.0
    %v1581 = vmax.f32 %v1432, 0.0
    %v1582 = vmax.f32 %v1461, 0.0
    %v1583 = vmax.f32 %v1490, 0.0
    %v1584 = vmax.f32 %v1519, 0.0
    %v1585 = vmax.f32 %v1521, 0.0
    %v1586 = vmax.f32 %v1529, 0.0
    %v1587 = vmax.f32 %v1537, 0.0
    %v1588 = vmax.f32 %v1545, 0.0
    %v1589 = vmax.f32 %v1553, 0.0
    %v1590 = vmax.f32 %v1561, 0.0
    %v1591 = vmax.f32 %v1569, 0.0
    %v1592 = vmax.f32 %v1577, 0.0
    %v1593 = vmax.f32 %v1585, %v1522
    %v1594 = vmax.f32 %v1586, %v1530
    %v1595 = vmax.f32 %v1587, %v1538
    %v1596 = vmax.f32 %v1588, %v1546
    %v1597 = vmax.f32 %v1589, %v1554
    %v1598 = vmax.f32 %v1590, %v1562
    %v1599 = vmax.f32 %v1591, %v1570
    %v1600 = vmax.f32 %v1592, %v1578
    %v1601 = vmax.f32 %v1593, %v1523
    %v1602 = vmax.f32 %v1594, %v1531
    %v1603 = vmax.f32 %v1595, %v1539
    %v1604 = vmax.f32 %v1596, %v1547
    %v1605 = vmax.f32 %v1597, %v1555
    %v1606 = vmax.f32 %v1598, %v1563
    %v1607 = vmax.f32 %v1599, %v1571
    %v1608 = vmax.f32 %v1600, %v1579
    %v1609 = vmax.f32 %v1601, %v1524
    %v1610 = vmax.f32 %v1602, %v1532
    %v1611 = vmax.f32 %v1603, %v1540
    %v1612 = vmax.f32 %v1604, %v1548
    %v1613 = vmax.f32 %v1605, %v1556
    %v1614 = vmax.f32 %v1606, %v1564
    %v1615 = vmax.f32 %v1607, %v1572
    %v1616 = vmax.f32 %v1608, %v1580
    %v1617 = vmax.f32 %v1609, %v1525
    %v1618 = vmax.f32 %v1610, %v1533
    %v1619 = vmax.f32 %v1611, %v1541
    %v1620 = vmax.f32 %v1612, %v1549
    %v1621 = vmax.f32 %v1613, %v1557
    %v1622 = vmax.f32 %v1614, %v1565
    %v1623 = vmax.f32 %v1615, %v1573
    %v1624 = vmax.f32 %v1616, %v1581
    %v1625 = vmax.f32 %v1617, %v1526
    %v1626 = vmax.f32 %v1618, %v1534
    %v1627 = vmax.f32 %v1619, %v1542
    %v1628 = vmax.f32 %v1620, %v1550
    %v1629 = vmax.f32 %v1621, %v1558
    %v1630 = vmax.f32 %v1622, %v1566
    %v1631 = vmax.f32 %v1623, %v1574
    %v1632 = vmax.f32 %v1624, %v1582
    %v1633 = vmax.f32 %v1625, %v1527
    %v1634 = vmax.f32 %v1626, %v1535
    %v1635 = vmax.f32 %v1627, %v1543
    %v1636 = vmax.f32 %v1628, %v1551
    %v1637 = vmax.f32 %v1629, %v1559
    %v1638 = vmax.f32 %v1630, %v1567
    %v1639 = vmax.f32 %v1631, %v1575
    %v1640 = vmax.f32 %v1632, %v1583
    %v1641 = vmax.f32 %v1633, %v1528
    %v1642 = vmax.f32 %v1634, %v1536
    %v1643 = vmax.f32 %v1635, %v1544
    %v1644 = vmax.f32 %v1636, %v1552
    %v1645 = vmax.f32 %v1637, %v1560
    %v1646 = vmax.f32 %v1638, %v1568
    %v1647 = vmax.f32 %v1639, %v1576
    %v1648 = vmax.f32 %v1640, %v1584
    %s1649 = scalar_lea.vmem %s46, 16
    %v1650 = vld [vmem:[%s1649] sm:$0xff]
    %v1651 = vld [vmem:[%s1649 + $0x8] sm:$0xff]
    %1653 = vst [vmem:[#allocation1] ss:$4 sm:$0xff] %v1650
    %s1655 = scalar_lea.vmem [#allocation1], 32
    %1656 = vst [vmem:[%s1655] ss:$4 sm:$0xff] %v1651
    %v1657 = vld.sshfl [vmem:[#allocation1] sm:$0xff pattern:$0x73625140]
    %v1658 = vld.sshfl [vmem:[#allocation1 + $0x8] sm:$0xff pattern:$0x73625140]
    %v1659 = vld.sshfl [vmem:[#allocation1 + $0x10] sm:$0xff pattern:$0x73625140]
    %v1660 = vld.sshfl [vmem:[#allocation1 + $0x18] sm:$0xff pattern:$0x73625140]
    %v1661 = vld.sshfl [vmem:[#allocation1 + $0x20] sm:$0xff pattern:$0x73625140]
    %v1662 = vld.sshfl [vmem:[#allocation1 + $0x28] sm:$0xff pattern:$0x73625140]
    %v1663 = vld.sshfl [vmem:[#allocation1 + $0x30] sm:$0xff pattern:$0x73625140]
    %v1664 = vld.sshfl [vmem:[#allocation1 + $0x38] sm:$0xff pattern:$0x73625140]
    %v1665 = vsel %vm134, %v1657, 0
    %v1667 = vsel %vm134, %v1658, 0
    %v1669 = vsel %vm134, %v1659, 0
    %v1671 = vsel %vm134, %v1660, 0
    %v1673 = vsel %vm134, %v1661, 0
    %v1675 = vsel %vm134, %v1662, 0
    %v1677 = vsel %vm134, %v1663, 0
    %v1679 = vsel %vm134, %v1664, 0
    %1681 = vmatpush.bf16.msra.mxu0 0
    %1682 = vmatpush.bf16.msra.mxu0 0
    %1683 = vmatpush.bf16.msra.mxu0 0
    %1684 = vmatpush.bf16.msra.mxu0 0
    %1685 = vmatpush.bf16.msra.mxu0 0
    %1686 = vmatpush.bf16.msra.mxu0 0
    %1687 = vmatpush.bf16.msra.mxu0 0
    %1688 = vmatpush.bf16.msra.mxu0 %v1665
    %1689 = vmatmul.bf16.gmra.mxu0 %v129
    %v1690 = vpop.f32.mrf.mxu0
    %v1691 = vadd.f32 0.0, %v1690
    %v1692 = vpop.f32.mrf.mxu0
    %v1693 = vadd.f32 0.0, %v1692
    %1694 = vmatmul.bf16.gmra.mxu0 %v132
    %v1695 = vpop.f32.mrf.mxu0
    %v1696 = vadd.f32 0.0, %v1695
    %v1697 = vpop.f32.mrf.mxu0
    %v1698 = vadd.f32 0.0, %v1697
    %1699 = vdwg.mxu0
    %1700 = vmatpush.bf16.msra.mxu0 0
    %1701 = vmatpush.bf16.msra.mxu0 0
    %1702 = vmatpush.bf16.msra.mxu0 0
    %1703 = vmatpush.bf16.msra.mxu0 0
    %1704 = vmatpush.bf16.msra.mxu0 0
    %1705 = vmatpush.bf16.msra.mxu0 0
    %1706 = vmatpush.bf16.msra.mxu0 0
    %1707 = vmatpush.bf16.msra.mxu0 %v1667
    %1708 = vmatmul.bf16.gmra.mxu0 %v129
    %v1709 = vpop.f32.mrf.mxu0
    %v1710 = vadd.f32 0.0, %v1709
    %v1711 = vpop.f32.mrf.mxu0
    %v1712 = vadd.f32 0.0, %v1711
    %1713 = vmatmul.bf16.gmra.mxu0 %v132
    %v1714 = vpop.f32.mrf.mxu0
    %v1715 = vadd.f32 0.0, %v1714
    %v1716 = vpop.f32.mrf.mxu0
    %v1717 = vadd.f32 0.0, %v1716
    %1718 = vdwg.mxu0
    %1719 = vmatpush.bf16.msra.mxu0 0
    %1720 = vmatpush.bf16.msra.mxu0 0
    %1721 = vmatpush.bf16.msra.mxu0 0
    %1722 = vmatpush.bf16.msra.mxu0 0
    %1723 = vmatpush.bf16.msra.mxu0 0
    %1724 = vmatpush.bf16.msra.mxu0 0
    %1725 = vmatpush.bf16.msra.mxu0 0
    %1726 = vmatpush.bf16.msra.mxu0 %v1669
    %1727 = vmatmul.bf16.gmra.mxu0 %v129
    %v1728 = vpop.f32.mrf.mxu0
    %v1729 = vadd.f32 0.0, %v1728
    %v1730 = vpop.f32.mrf.mxu0
    %v1731 = vadd.f32 0.0, %v1730
    %1732 = vmatmul.bf16.gmra.mxu0 %v132
    %v1733 = vpop.f32.mrf.mxu0
    %v1734 = vadd.f32 0.0, %v1733
    %v1735 = vpop.f32.mrf.mxu0
    %v1736 = vadd.f32 0.0, %v1735
    %1737 = vdwg.mxu0
    %1738 = vmatpush.bf16.msra.mxu0 0
    %1739 = vmatpush.bf16.msra.mxu0 0
    %1740 = vmatpush.bf16.msra.mxu0 0
    %1741 = vmatpush.bf16.msra.mxu0 0
    %1742 = vmatpush.bf16.msra.mxu0 0
    %1743 = vmatpush.bf16.msra.mxu0 0
    %1744 = vmatpush.bf16.msra.mxu0 0
    %1745 = vmatpush.bf16.msra.mxu0 %v1671
    %1746 = vmatmul.bf16.gmra.mxu0 %v129
    %v1747 = vpop.f32.mrf.mxu0
    %v1748 = vadd.f32 0.0, %v1747
    %v1749 = vpop.f32.mrf.mxu0
    %v1750 = vadd.f32 0.0, %v1749
    %1751 = vmatmul.bf16.gmra.mxu0 %v132
    %v1752 = vpop.f32.mrf.mxu0
    %v1753 = vadd.f32 0.0, %v1752
    %v1754 = vpop.f32.mrf.mxu0
    %v1755 = vadd.f32 0.0, %v1754
    %1756 = vdwg.mxu0
    %1757 = vmatpush.bf16.msra.mxu0 0
    %1758 = vmatpush.bf16.msra.mxu0 0
    %1759 = vmatpush.bf16.msra.mxu0 0
    %1760 = vmatpush.bf16.msra.mxu0 0
    %1761 = vmatpush.bf16.msra.mxu0 0
    %1762 = vmatpush.bf16.msra.mxu0 0
    %1763 = vmatpush.bf16.msra.mxu0 0
    %1764 = vmatpush.bf16.msra.mxu0 %v1673
    %1765 = vmatmul.bf16.gmra.mxu0 %v129
    %v1766 = vpop.f32.mrf.mxu0
    %v1767 = vadd.f32 0.0, %v1766
    %v1768 = vpop.f32.mrf.mxu0
    %v1769 = vadd.f32 0.0, %v1768
    %1770 = vmatmul.bf16.gmra.mxu0 %v132
    %v1771 = vpop.f32.mrf.mxu0
    %v1772 = vadd.f32 0.0, %v1771
    %v1773 = vpop.f32.mrf.mxu0
    %v1774 = vadd.f32 0.0, %v1773
    %1775 = vdwg.mxu0
    %1776 = vmatpush.bf16.msra.mxu0 0
    %1777 = vmatpush.bf16.msra.mxu0 0
    %1778 = vmatpush.bf16.msra.mxu0 0
    %1779 = vmatpush.bf16.msra.mxu0 0
    %1780 = vmatpush.bf16.msra.mxu0 0
    %1781 = vmatpush.bf16.msra.mxu0 0
    %1782 = vmatpush.bf16.msra.mxu0 0
    %1783 = vmatpush.bf16.msra.mxu0 %v1675
    %1784 = vmatmul.bf16.gmra.mxu0 %v129
    %v1785 = vpop.f32.mrf.mxu0
    %v1786 = vadd.f32 0.0, %v1785
    %v1787 = vpop.f32.mrf.mxu0
    %v1788 = vadd.f32 0.0, %v1787
    %1789 = vmatmul.bf16.gmra.mxu0 %v132
    %v1790 = vpop.f32.mrf.mxu0
    %v1791 = vadd.f32 0.0, %v1790
    %v1792 = vpop.f32.mrf.mxu0
    %v1793 = vadd.f32 0.0, %v1792
    %1794 = vdwg.mxu0
    %1795 = vmatpush.bf16.msra.mxu0 0
    %1796 = vmatpush.bf16.msra.mxu0 0
    %1797 = vmatpush.bf16.msra.mxu0 0
    %1798 = vmatpush.bf16.msra.mxu0 0
    %1799 = vmatpush.bf16.msra.mxu0 0
    %1800 = vmatpush.bf16.msra.mxu0 0
    %1801 = vmatpush.bf16.msra.mxu0 0
    %1802 = vmatpush.bf16.msra.mxu0 %v1677
    %1803 = vmatmul.bf16.gmra.mxu0 %v129
    %v1804 = vpop.f32.mrf.mxu0
    %v1805 = vadd.f32 0.0, %v1804
    %v1806 = vpop.f32.mrf.mxu0
    %v1807 = vadd.f32 0.0, %v1806
    %1808 = vmatmul.bf16.gmra.mxu0 %v132
    %v1809 = vpop.f32.mrf.mxu0
    %v1810 = vadd.f32 0.0, %v1809
    %v1811 = vpop.f32.mrf.mxu0
    %v1812 = vadd.f32 0.0, %v1811
    %1813 = vdwg.mxu0
    %1814 = vmatpush.bf16.msra.mxu0 0
    %1815 = vmatpush.bf16.msra.mxu0 0
    %1816 = vmatpush.bf16.msra.mxu0 0
    %1817 = vmatpush.bf16.msra.mxu0 0
    %1818 = vmatpush.bf16.msra.mxu0 0
    %1819 = vmatpush.bf16.msra.mxu0 0
    %1820 = vmatpush.bf16.msra.mxu0 0
    %1821 = vmatpush.bf16.msra.mxu0 %v1679
    %1822 = vmatmul.bf16.gmra.mxu0 %v129
    %v1823 = vpop.f32.mrf.mxu0
    %v1824 = vadd.f32 0.0, %v1823
    %v1825 = vpop.f32.mrf.mxu0
    %v1826 = vadd.f32 0.0, %v1825
    %1827 = vmatmul.bf16.gmra.mxu0 %v132
    %v1828 = vpop.f32.mrf.mxu0
    %v1829 = vadd.f32 0.0, %v1828
    %v1830 = vpop.f32.mrf.mxu0
    %v1831 = vadd.f32 0.0, %v1830
    %1832 = vdwg.mxu0
    %v1833 = vpack.c.bf16 %v1710, %v1691
    %v1834 = vpack.c.bf16 %v1748, %v1729
    %v1835 = vpack.c.bf16 %v1786, %v1767
    %v1836 = vpack.c.bf16 %v1824, %v1805
    %v1837 = vpack.c.bf16 %v1712, %v1693
    %v1838 = vpack.c.bf16 %v1750, %v1731
    %v1839 = vpack.c.bf16 %v1788, %v1769
    %v1840 = vpack.c.bf16 %v1826, %v1807
    %v1841 = vpack.c.bf16 %v1715, %v1696
    %v1842 = vpack.c.bf16 %v1753, %v1734
    %v1843 = vpack.c.bf16 %v1791, %v1772
    %v1844 = vpack.c.bf16 %v1829, %v1810
    %v1845 = vpack.c.bf16 %v1717, %v1698
    %v1846 = vpack.c.bf16 %v1755, %v1736
    %v1847 = vpack.c.bf16 %v1793, %v1774
    %v1848 = vpack.c.bf16 %v1831, %v1812
    %v1849 = vunpack.c.l.bf16 %v1833
    %v1850 = vunpack.c.h.bf16 %v1833
    %v1851 = vunpack.c.l.bf16 %v1834
    %v1852 = vunpack.c.h.bf16 %v1834
    %v1853 = vunpack.c.l.bf16 %v1835
    %v1854 = vunpack.c.h.bf16 %v1835
    %v1855 = vunpack.c.l.bf16 %v1836
    %v1856 = vunpack.c.h.bf16 %v1836
    %v1857 = vunpack.c.l.bf16 %v1837
    %v1858 = vunpack.c.h.bf16 %v1837
    %v1859 = vunpack.c.l.bf16 %v1838
    %v1860 = vunpack.c.h.bf16 %v1838
    %v1861 = vunpack.c.l.bf16 %v1839
    %v1862 = vunpack.c.h.bf16 %v1839
    %v1863 = vunpack.c.l.bf16 %v1840
    %v1864 = vunpack.c.h.bf16 %v1840
    %v1865 = vunpack.c.l.bf16 %v1841
    %v1866 = vunpack.c.h.bf16 %v1841
    %v1867 = vunpack.c.l.bf16 %v1842
    %v1868 = vunpack.c.h.bf16 %v1842
    %v1869 = vunpack.c.l.bf16 %v1843
    %v1870 = vunpack.c.h.bf16 %v1843
    %v1871 = vunpack.c.l.bf16 %v1844
    %v1872 = vunpack.c.h.bf16 %v1844
    %v1873 = vunpack.c.l.bf16 %v1845
    %v1874 = vunpack.c.h.bf16 %v1845
    %v1875 = vunpack.c.l.bf16 %v1846
    %v1876 = vunpack.c.h.bf16 %v1846
    %v1877 = vunpack.c.l.bf16 %v1847
    %v1878 = vunpack.c.h.bf16 %v1847
    %v1879 = vunpack.c.l.bf16 %v1848
    %v1880 = vunpack.c.h.bf16 %v1848
    %v1881 = vadd.f32 %v1849, %v387
    %v1882 = vadd.f32 %v1850, %v387
    %v1883 = vadd.f32 %v1851, %v387
    %v1884 = vadd.f32 %v1852, %v387
    %v1885 = vadd.f32 %v1853, %v387
    %v1886 = vadd.f32 %v1854, %v387
    %v1887 = vadd.f32 %v1855, %v387
    %v1888 = vadd.f32 %v1856, %v387
    %v1889 = vadd.f32 %v1857, %v388
    %v1890 = vadd.f32 %v1858, %v388
    %v1891 = vadd.f32 %v1859, %v388
    %v1892 = vadd.f32 %v1860, %v388
    %v1893 = vadd.f32 %v1861, %v388
    %v1894 = vadd.f32 %v1862, %v388
    %v1895 = vadd.f32 %v1863, %v388
    %v1896 = vadd.f32 %v1864, %v388
    %v1897 = vadd.f32 %v1865, %v389
    %v1898 = vadd.f32 %v1866, %v389
    %v1899 = vadd.f32 %v1867, %v389
    %v1900 = vadd.f32 %v1868, %v389
    %v1901 = vadd.f32 %v1869, %v389
    %v1902 = vadd.f32 %v1870, %v389
    %v1903 = vadd.f32 %v1871, %v389
    %v1904 = vadd.f32 %v1872, %v389
    %v1905 = vadd.f32 %v1873, %v390
    %v1906 = vadd.f32 %v1874, %v390
    %v1907 = vadd.f32 %v1875, %v390
    %v1908 = vadd.f32 %v1876, %v390
    %v1909 = vadd.f32 %v1877, %v390
    %v1910 = vadd.f32 %v1878, %v390
    %v1911 = vadd.f32 %v1879, %v390
    %v1912 = vadd.f32 %v1880, %v390
    %v1913 = vpack.c.bf16 %v1882, %v1881
    %v1914 = vpack.c.bf16 %v1884, %v1883
    %v1915 = vpack.c.bf16 %v1886, %v1885
    %v1916 = vpack.c.bf16 %v1888, %v1887
    %v1917 = vpack.c.bf16 %v1890, %v1889
    %v1918 = vpack.c.bf16 %v1892, %v1891
    %v1919 = vpack.c.bf16 %v1894, %v1893
    %v1920 = vpack.c.bf16 %v1896, %v1895
    %v1921 = vpack.c.bf16 %v1898, %v1897
    %v1922 = vpack.c.bf16 %v1900, %v1899
    %v1923 = vpack.c.bf16 %v1902, %v1901
    %v1924 = vpack.c.bf16 %v1904, %v1903
    %v1925 = vpack.c.bf16 %v1906, %v1905
    %v1926 = vpack.c.bf16 %v1908, %v1907
    %v1927 = vpack.c.bf16 %v1910, %v1909
    %v1928 = vpack.c.bf16 %v1912, %v1911
    %v1929 = vunpack.c.l.bf16 %v1913
    %v1930 = vunpack.c.h.bf16 %v1913
    %v1931 = vunpack.c.l.bf16 %v1914
    %v1932 = vunpack.c.h.bf16 %v1914
    %v1933 = vunpack.c.l.bf16 %v1915
    %v1934 = vunpack.c.h.bf16 %v1915
    %v1935 = vunpack.c.l.bf16 %v1916
    %v1936 = vunpack.c.h.bf16 %v1916
    %v1937 = vunpack.c.l.bf16 %v1917
    %v1938 = vunpack.c.h.bf16 %v1917
    %v1939 = vunpack.c.l.bf16 %v1918
    %v1940 = vunpack.c.h.bf16 %v1918
    %v1941 = vunpack.c.l.bf16 %v1919
    %v1942 = vunpack.c.h.bf16 %v1919
    %v1943 = vunpack.c.l.bf16 %v1920
    %v1944 = vunpack.c.h.bf16 %v1920
    %v1945 = vunpack.c.l.bf16 %v1921
    %v1946 = vunpack.c.h.bf16 %v1921
    %v1947 = vunpack.c.l.bf16 %v1922
    %v1948 = vunpack.c.h.bf16 %v1922
    %v1949 = vunpack.c.l.bf16 %v1923
    %v1950 = vunpack.c.h.bf16 %v1923
    %v1951 = vunpack.c.l.bf16 %v1924
    %v1952 = vunpack.c.h.bf16 %v1924
    %v1953 = vunpack.c.l.bf16 %v1925
    %v1954 = vunpack.c.h.bf16 %v1925
    %v1955 = vunpack.c.l.bf16 %v1926
    %v1956 = vunpack.c.h.bf16 %v1926
    %v1957 = vunpack.c.l.bf16 %v1927
    %v1958 = vunpack.c.h.bf16 %v1927
    %v1959 = vunpack.c.l.bf16 %v1928
    %v1960 = vunpack.c.h.bf16 %v1928
    %v1961 = vmax.f32 %v1929, 0.0
    %v1962 = vmax.f32 %v1930, 0.0
    %v1963 = vmax.f32 %v1931, 0.0
    %v1964 = vmax.f32 %v1932, 0.0
    %v1965 = vmax.f32 %v1933, 0.0
    %v1966 = vmax.f32 %v1934, 0.0
    %v1967 = vmax.f32 %v1935, 0.0
    %v1968 = vmax.f32 %v1936, 0.0
    %v1969 = vmax.f32 %v1937, 0.0
    %v1970 = vmax.f32 %v1938, 0.0
    %v1971 = vmax.f32 %v1939, 0.0
    %v1972 = vmax.f32 %v1940, 0.0
    %v1973 = vmax.f32 %v1941, 0.0
    %v1974 = vmax.f32 %v1942, 0.0
    %v1975 = vmax.f32 %v1943, 0.0
    %v1976 = vmax.f32 %v1944, 0.0
    %v1977 = vmax.f32 %v1945, 0.0
    %v1978 = vmax.f32 %v1946, 0.0
    %v1979 = vmax.f32 %v1947, 0.0
    %v1980 = vmax.f32 %v1948, 0.0
    %v1981 = vmax.f32 %v1949, 0.0
    %v1982 = vmax.f32 %v1950, 0.0
    %v1983 = vmax.f32 %v1951, 0.0
    %v1984 = vmax.f32 %v1952, 0.0
    %v1985 = vmax.f32 %v1953, 0.0
    %v1986 = vmax.f32 %v1954, 0.0
    %v1987 = vmax.f32 %v1955, 0.0
    %v1988 = vmax.f32 %v1956, 0.0
    %v1989 = vmax.f32 %v1957, 0.0
    %v1990 = vmax.f32 %v1958, 0.0
    %v1991 = vmax.f32 %v1959, 0.0
    %v1992 = vmax.f32 %v1960, 0.0
    %v1993 = vpack.c.bf16 %v1969, %v1961
    %v1994 = vpack.c.bf16 %v1970, %v1962
    %v1995 = vpack.c.bf16 %v1971, %v1963
    %v1996 = vpack.c.bf16 %v1972, %v1964
    %v1997 = vpack.c.bf16 %v1973, %v1965
    %v1998 = vpack.c.bf16 %v1974, %v1966
    %v1999 = vpack.c.bf16 %v1975, %v1967
    %v2000 = vpack.c.bf16 %v1976, %v1968
    %v2001 = vpack.c.bf16 %v1985, %v1977
    %v2002 = vpack.c.bf16 %v1986, %v1978
    %v2003 = vpack.c.bf16 %v1987, %v1979
    %v2004 = vpack.c.bf16 %v1988, %v1980
    %v2005 = vpack.c.bf16 %v1989, %v1981
    %v2006 = vpack.c.bf16 %v1990, %v1982
    %v2007 = vpack.c.bf16 %v1991, %v1983
    %v2008 = vpack.c.bf16 %v1992, %v1984
    %2009 = vmatpush.bf16.msra.mxu0 0
    %2010 = vmatpush.bf16.msra.mxu0 0
    %2011 = vmatpush.bf16.msra.mxu0 0
    %2012 = vmatpush.bf16.msra.mxu0 0
    %2013 = vmatpush.bf16.msra.mxu0 0
    %2014 = vmatpush.bf16.msra.mxu0 0
    %2015 = vmatpush.bf16.msra.mxu0 %v2001
    %2016 = vmatpush.bf16.msra.mxu0 %v1993
    %2017 = vmatmul.bf16.gmra.mxu0 %v541
    %v2018 = vpop.f32.mrf.mxu0
    %v2019 = vadd.f32 0.0, %v2018
    %v2020 = vpop.f32.mrf.mxu0
    %v2021 = vadd.f32 0.0, %v2020
    %2022 = vmatmul.bf16.gmra.mxu0 %v544
    %v2023 = vpop.f32.mrf.mxu0
    %v2024 = vadd.f32 0.0, %v2023
    %v2025 = vpop.f32.mrf.mxu0
    %v2026 = vadd.f32 0.0, %v2025
    %2027 = vmatmul.bf16.gmra.mxu0 %v547
    %v2028 = vpop.f32.mrf.mxu0
    %v2029 = vadd.f32 0.0, %v2028
    %v2030 = vpop.f32.mrf.mxu0
    %v2031 = vadd.f32 0.0, %v2030
    %2032 = vmatmul.bf16.gmra.mxu0 %v550
    %v2033 = vpop.f32.mrf.mxu0
    %v2034 = vadd.f32 0.0, %v2033
    %v2035 = vpop.f32.mrf.mxu0
    %v2036 = vadd.f32 0.0, %v2035
    %2037 = vdwg.mxu0
    %2038 = vmatpush.bf16.msra.mxu0 0
    %2039 = vmatpush.bf16.msra.mxu0 0
    %2040 = vmatpush.bf16.msra.mxu0 0
    %2041 = vmatpush.bf16.msra.mxu0 0
    %2042 = vmatpush.bf16.msra.mxu0 0
    %2043 = vmatpush.bf16.msra.mxu0 0
    %2044 = vmatpush.bf16.msra.mxu0 %v2002
    %2045 = vmatpush.bf16.msra.mxu0 %v1994
    %2046 = vmatmul.bf16.gmra.mxu0 %v541
    %v2047 = vpop.f32.mrf.mxu0
    %v2048 = vadd.f32 0.0, %v2047
    %v2049 = vpop.f32.mrf.mxu0
    %v2050 = vadd.f32 0.0, %v2049
    %2051 = vmatmul.bf16.gmra.mxu0 %v544
    %v2052 = vpop.f32.mrf.mxu0
    %v2053 = vadd.f32 0.0, %v2052
    %v2054 = vpop.f32.mrf.mxu0
    %v2055 = vadd.f32 0.0, %v2054
    %2056 = vmatmul.bf16.gmra.mxu0 %v547
    %v2057 = vpop.f32.mrf.mxu0
    %v2058 = vadd.f32 0.0, %v2057
    %v2059 = vpop.f32.mrf.mxu0
    %v2060 = vadd.f32 0.0, %v2059
    %2061 = vmatmul.bf16.gmra.mxu0 %v550
    %v2062 = vpop.f32.mrf.mxu0
    %v2063 = vadd.f32 0.0, %v2062
    %v2064 = vpop.f32.mrf.mxu0
    %v2065 = vadd.f32 0.0, %v2064
    %2066 = vdwg.mxu0
    %2067 = vmatpush.bf16.msra.mxu0 0
    %2068 = vmatpush.bf16.msra.mxu0 0
    %2069 = vmatpush.bf16.msra.mxu0 0
    %2070 = vmatpush.bf16.msra.mxu0 0
    %2071 = vmatpush.bf16.msra.mxu0 0
    %2072 = vmatpush.bf16.msra.mxu0 0
    %2073 = vmatpush.bf16.msra.mxu0 %v2003
    %2074 = vmatpush.bf16.msra.mxu0 %v1995
    %2075 = vmatmul.bf16.gmra.mxu0 %v541
    %v2076 = vpop.f32.mrf.mxu0
    %v2077 = vadd.f32 0.0, %v2076
    %v2078 = vpop.f32.mrf.mxu0
    %v2079 = vadd.f32 0.0, %v2078
    %2080 = vmatmul.bf16.gmra.mxu0 %v544
    %v2081 = vpop.f32.mrf.mxu0
    %v2082 = vadd.f32 0.0, %v2081
    %v2083 = vpop.f32.mrf.mxu0
    %v2084 = vadd.f32 0.0, %v2083
    %2085 = vmatmul.bf16.gmra.mxu0 %v547
    %v2086 = vpop.f32.mrf.mxu0
    %v2087 = vadd.f32 0.0, %v2086
    %v2088 = vpop.f32.mrf.mxu0
    %v2089 = vadd.f32 0.0, %v2088
    %2090 = vmatmul.bf16.gmra.mxu0 %v550
    %v2091 = vpop.f32.mrf.mxu0
    %v2092 = vadd.f32 0.0, %v2091
    %v2093 = vpop.f32.mrf.mxu0
    %v2094 = vadd.f32 0.0, %v2093
    %2095 = vdwg.mxu0
    %2096 = vmatpush.bf16.msra.mxu0 0
    %2097 = vmatpush.bf16.msra.mxu0 0
    %2098 = vmatpush.bf16.msra.mxu0 0
    %2099 = vmatpush.bf16.msra.mxu0 0
    %2100 = vmatpush.bf16.msra.mxu0 0
    %2101 = vmatpush.bf16.msra.mxu0 0
    %2102 = vmatpush.bf16.msra.mxu0 %v2004
    %2103 = vmatpush.bf16.msra.mxu0 %v1996
    %2104 = vmatmul.bf16.gmra.mxu0 %v541
    %v2105 = vpop.f32.mrf.mxu0
    %v2106 = vadd.f32 0.0, %v2105
    %v2107 = vpop.f32.mrf.mxu0
    %v2108 = vadd.f32 0.0, %v2107
    %2109 = vmatmul.bf16.gmra.mxu0 %v544
    %v2110 = vpop.f32.mrf.mxu0
    %v2111 = vadd.f32 0.0, %v2110
    %v2112 = vpop.f32.mrf.mxu0
    %v2113 = vadd.f32 0.0, %v2112
    %2114 = vmatmul.bf16.gmra.mxu0 %v547
    %v2115 = vpop.f32.mrf.mxu0
    %v2116 = vadd.f32 0.0, %v2115
    %v2117 = vpop.f32.mrf.mxu0
    %v2118 = vadd.f32 0.0, %v2117
    %2119 = vmatmul.bf16.gmra.mxu0 %v550
    %v2120 = vpop.f32.mrf.mxu0
    %v2121 = vadd.f32 0.0, %v2120
    %v2122 = vpop.f32.mrf.mxu0
    %v2123 = vadd.f32 0.0, %v2122
    %2124 = vdwg.mxu0
    %2125 = vmatpush.bf16.msra.mxu0 0
    %2126 = vmatpush.bf16.msra.mxu0 0
    %2127 = vmatpush.bf16.msra.mxu0 0
    %2128 = vmatpush.bf16.msra.mxu0 0
    %2129 = vmatpush.bf16.msra.mxu0 0
    %2130 = vmatpush.bf16.msra.mxu0 0
    %2131 = vmatpush.bf16.msra.mxu0 %v2005
    %2132 = vmatpush.bf16.msra.mxu0 %v1997
    %2133 = vmatmul.bf16.gmra.mxu0 %v541
    %v2134 = vpop.f32.mrf.mxu0
    %v2135 = vadd.f32 0.0, %v2134
    %v2136 = vpop.f32.mrf.mxu0
    %v2137 = vadd.f32 0.0, %v2136
    %2138 = vmatmul.bf16.gmra.mxu0 %v544
    %v2139 = vpop.f32.mrf.mxu0
    %v2140 = vadd.f32 0.0, %v2139
    %v2141 = vpop.f32.mrf.mxu0
    %v2142 = vadd.f32 0.0, %v2141
    %2143 = vmatmul.bf16.gmra.mxu0 %v547
    %v2144 = vpop.f32.mrf.mxu0
    %v2145 = vadd.f32 0.0, %v2144
    %v2146 = vpop.f32.mrf.mxu0
    %v2147 = vadd.f32 0.0, %v2146
    %2148 = vmatmul.bf16.gmra.mxu0 %v550
    %v2149 = vpop.f32.mrf.mxu0
    %v2150 = vadd.f32 0.0, %v2149
    %v2151 = vpop.f32.mrf.mxu0
    %v2152 = vadd.f32 0.0, %v2151
    %2153 = vdwg.mxu0
    %2154 = vmatpush.bf16.msra.mxu0 0
    %2155 = vmatpush.bf16.msra.mxu0 0
    %2156 = vmatpush.bf16.msra.mxu0 0
    %2157 = vmatpush.bf16.msra.mxu0 0
    %2158 = vmatpush.bf16.msra.mxu0 0
    %2159 = vmatpush.bf16.msra.mxu0 0
    %2160 = vmatpush.bf16.msra.mxu0 %v2006
    %2161 = vmatpush.bf16.msra.mxu0 %v1998
    %2162 = vmatmul.bf16.gmra.mxu0 %v541
    %v2163 = vpop.f32.mrf.mxu0
    %v2164 = vadd.f32 0.0, %v2163
    %v2165 = vpop.f32.mrf.mxu0
    %v2166 = vadd.f32 0.0, %v2165
    %2167 = vmatmul.bf16.gmra.mxu0 %v544
    %v2168 = vpop.f32.mrf.mxu0
    %v2169 = vadd.f32 0.0, %v2168
    %v2170 = vpop.f32.mrf.mxu0
    %v2171 = vadd.f32 0.0, %v2170
    %2172 = vmatmul.bf16.gmra.mxu0 %v547
    %v2173 = vpop.f32.mrf.mxu0
    %v2174 = vadd.f32 0.0, %v2173
    %v2175 = vpop.f32.mrf.mxu0
    %v2176 = vadd.f32 0.0, %v2175
    %2177 = vmatmul.bf16.gmra.mxu0 %v550
    %v2178 = vpop.f32.mrf.mxu0
    %v2179 = vadd.f32 0.0, %v2178
    %v2180 = vpop.f32.mrf.mxu0
    %v2181 = vadd.f32 0.0, %v2180
    %2182 = vdwg.mxu0
    %2183 = vmatpush.bf16.msra.mxu0 0
    %2184 = vmatpush.bf16.msra.mxu0 0
    %2185 = vmatpush.bf16.msra.mxu0 0
    %2186 = vmatpush.bf16.msra.mxu0 0
    %2187 = vmatpush.bf16.msra.mxu0 0
    %2188 = vmatpush.bf16.msra.mxu0 0
    %2189 = vmatpush.bf16.msra.mxu0 %v2007
    %2190 = vmatpush.bf16.msra.mxu0 %v1999
    %2191 = vmatmul.bf16.gmra.mxu0 %v541
    %v2192 = vpop.f32.mrf.mxu0
    %v2193 = vadd.f32 0.0, %v2192
    %v2194 = vpop.f32.mrf.mxu0
    %v2195 = vadd.f32 0.0, %v2194
    %2196 = vmatmul.bf16.gmra.mxu0 %v544
    %v2197 = vpop.f32.mrf.mxu0
    %v2198 = vadd.f32 0.0, %v2197
    %v2199 = vpop.f32.mrf.mxu0
    %v2200 = vadd.f32 0.0, %v2199
    %2201 = vmatmul.bf16.gmra.mxu0 %v547
    %v2202 = vpop.f32.mrf.mxu0
    %v2203 = vadd.f32 0.0, %v2202
    %v2204 = vpop.f32.mrf.mxu0
    %v2205 = vadd.f32 0.0, %v2204
    %2206 = vmatmul.bf16.gmra.mxu0 %v550
    %v2207 = vpop.f32.mrf.mxu0
    %v2208 = vadd.f32 0.0, %v2207
    %v2209 = vpop.f32.mrf.mxu0
    %v2210 = vadd.f32 0.0, %v2209
    %2211 = vdwg.mxu0
    %2212 = vmatpush.bf16.msra.mxu0 0
    %2213 = vmatpush.bf16.msra.mxu0 0
    %2214 = vmatpush.bf16.msra.mxu0 0
    %2215 = vmatpush.bf16.msra.mxu0 0
    %2216 = vmatpush.bf16.msra.mxu0 0
    %2217 = vmatpush.bf16.msra.mxu0 0
    %2218 = vmatpush.bf16.msra.mxu0 %v2008
    %2219 = vmatpush.bf16.msra.mxu0 %v2000
    %2220 = vmatmul.bf16.gmra.mxu0 %v541
    %v2221 = vpop.f32.mrf.mxu0
    %v2222 = vadd.f32 0.0, %v2221
    %v2223 = vpop.f32.mrf.mxu0
    %v2224 = vadd.f32 0.0, %v2223
    %2225 = vmatmul.bf16.gmra.mxu0 %v544
    %v2226 = vpop.f32.mrf.mxu0
    %v2227 = vadd.f32 0.0, %v2226
    %v2228 = vpop.f32.mrf.mxu0
    %v2229 = vadd.f32 0.0, %v2228
    %2230 = vmatmul.bf16.gmra.mxu0 %v547
    %v2231 = vpop.f32.mrf.mxu0
    %v2232 = vadd.f32 0.0, %v2231
    %v2233 = vpop.f32.mrf.mxu0
    %v2234 = vadd.f32 0.0, %v2233
    %2235 = vmatmul.bf16.gmra.mxu0 %v550
    %v2236 = vpop.f32.mrf.mxu0
    %v2237 = vadd.f32 0.0, %v2236
    %v2238 = vpop.f32.mrf.mxu0
    %v2239 = vadd.f32 0.0, %v2238
    %2240 = vdwg.mxu0
    %v2241 = vpack.c.bf16 %v2048, %v2019
    %v2242 = vpack.c.bf16 %v2106, %v2077
    %v2243 = vpack.c.bf16 %v2164, %v2135
    %v2244 = vpack.c.bf16 %v2222, %v2193
    %v2245 = vpack.c.bf16 %v2050, %v2021
    %v2246 = vpack.c.bf16 %v2108, %v2079
    %v2247 = vpack.c.bf16 %v2166, %v2137
    %v2248 = vpack.c.bf16 %v2224, %v2195
    %v2249 = vpack.c.bf16 %v2053, %v2024
    %v2250 = vpack.c.bf16 %v2111, %v2082
    %v2251 = vpack.c.bf16 %v2169, %v2140
    %v2252 = vpack.c.bf16 %v2227, %v2198
    %v2253 = vpack.c.bf16 %v2055, %v2026
    %v2254 = vpack.c.bf16 %v2113, %v2084
    %v2255 = vpack.c.bf16 %v2171, %v2142
    %v2256 = vpack.c.bf16 %v2229, %v2200
    %v2257 = vpack.c.bf16 %v2058, %v2029
    %v2258 = vpack.c.bf16 %v2116, %v2087
    %v2259 = vpack.c.bf16 %v2174, %v2145
    %v2260 = vpack.c.bf16 %v2232, %v2203
    %v2261 = vpack.c.bf16 %v2060, %v2031
    %v2262 = vpack.c.bf16 %v2118, %v2089
    %v2263 = vpack.c.bf16 %v2176, %v2147
    %v2264 = vpack.c.bf16 %v2234, %v2205
    %v2265 = vpack.c.bf16 %v2063, %v2034
    %v2266 = vpack.c.bf16 %v2121, %v2092
    %v2267 = vpack.c.bf16 %v2179, %v2150
    %v2268 = vpack.c.bf16 %v2237, %v2208
    %v2269 = vpack.c.bf16 %v2065, %v2036
    %v2270 = vpack.c.bf16 %v2123, %v2094
    %v2271 = vpack.c.bf16 %v2181, %v2152
    %v2272 = vpack.c.bf16 %v2239, %v2210
    %v2273 = vunpack.c.l.bf16 %v2241
    %v2274 = vunpack.c.h.bf16 %v2241
    %v2275 = vunpack.c.l.bf16 %v2242
    %v2276 = vunpack.c.h.bf16 %v2242
    %v2277 = vunpack.c.l.bf16 %v2243
    %v2278 = vunpack.c.h.bf16 %v2243
    %v2279 = vunpack.c.l.bf16 %v2244
    %v2280 = vunpack.c.h.bf16 %v2244
    %v2281 = vunpack.c.l.bf16 %v2245
    %v2282 = vunpack.c.h.bf16 %v2245
    %v2283 = vunpack.c.l.bf16 %v2246
    %v2284 = vunpack.c.h.bf16 %v2246
    %v2285 = vunpack.c.l.bf16 %v2247
    %v2286 = vunpack.c.h.bf16 %v2247
    %v2287 = vunpack.c.l.bf16 %v2248
    %v2288 = vunpack.c.h.bf16 %v2248
    %v2289 = vunpack.c.l.bf16 %v2249
    %v2290 = vunpack.c.h.bf16 %v2249
    %v2291 = vunpack.c.l.bf16 %v2250
    %v2292 = vunpack.c.h.bf16 %v2250
    %v2293 = vunpack.c.l.bf16 %v2251
    %v2294 = vunpack.c.h.bf16 %v2251
    %v2295 = vunpack.c.l.bf16 %v2252
    %v2296 = vunpack.c.h.bf16 %v2252
    %v2297 = vunpack.c.l.bf16 %v2253
    %v2298 = vunpack.c.h.bf16 %v2253
    %v2299 = vunpack.c.l.bf16 %v2254
    %v2300 = vunpack.c.h.bf16 %v2254
    %v2301 = vunpack.c.l.bf16 %v2255
    %v2302 = vunpack.c.h.bf16 %v2255
    %v2303 = vunpack.c.l.bf16 %v2256
    %v2304 = vunpack.c.h.bf16 %v2256
    %v2305 = vunpack.c.l.bf16 %v2257
    %v2306 = vunpack.c.h.bf16 %v2257
    %v2307 = vunpack.c.l.bf16 %v2258
    %v2308 = vunpack.c.h.bf16 %v2258
    %v2309 = vunpack.c.l.bf16 %v2259
    %v2310 = vunpack.c.h.bf16 %v2259
    %v2311 = vunpack.c.l.bf16 %v2260
    %v2312 = vunpack.c.h.bf16 %v2260
    %v2313 = vunpack.c.l.bf16 %v2261
    %v2314 = vunpack.c.h.bf16 %v2261
    %v2315 = vunpack.c.l.bf16 %v2262
    %v2316 = vunpack.c.h.bf16 %v2262
    %v2317 = vunpack.c.l.bf16 %v2263
    %v2318 = vunpack.c.h.bf16 %v2263
    %v2319 = vunpack.c.l.bf16 %v2264
    %v2320 = vunpack.c.h.bf16 %v2264
    %v2321 = vunpack.c.l.bf16 %v2265
    %v2322 = vunpack.c.h.bf16 %v2265
    %v2323 = vunpack.c.l.bf16 %v2266
    %v2324 = vunpack.c.h.bf16 %v2266
    %v2325 = vunpack.c.l.bf16 %v2267
    %v2326 = vunpack.c.h.bf16 %v2267
    %v2327 = vunpack.c.l.bf16 %v2268
    %v2328 = vunpack.c.h.bf16 %v2268
    %v2329 = vunpack.c.l.bf16 %v2269
    %v2330 = vunpack.c.h.bf16 %v2269
    %v2331 = vunpack.c.l.bf16 %v2270
    %v2332 = vunpack.c.h.bf16 %v2270
    %v2333 = vunpack.c.l.bf16 %v2271
    %v2334 = vunpack.c.h.bf16 %v2271
    %v2335 = vunpack.c.l.bf16 %v2272
    %v2336 = vunpack.c.h.bf16 %v2272
    %v2337 = vadd.f32 %v2273, %v952
    %v2338 = vadd.f32 %v2274, %v952
    %v2339 = vadd.f32 %v2275, %v952
    %v2340 = vadd.f32 %v2276, %v952
    %v2341 = vadd.f32 %v2277, %v952
    %v2342 = vadd.f32 %v2278, %v952
    %v2343 = vadd.f32 %v2279, %v952
    %v2344 = vadd.f32 %v2280, %v952
    %v2345 = vadd.f32 %v2281, %v953
    %v2346 = vadd.f32 %v2282, %v953
    %v2347 = vadd.f32 %v2283, %v953
    %v2348 = vadd.f32 %v2284, %v953
    %v2349 = vadd.f32 %v2285, %v953
    %v2350 = vadd.f32 %v2286, %v953
    %v2351 = vadd.f32 %v2287, %v953
    %v2352 = vadd.f32 %v2288, %v953
    %v2353 = vadd.f32 %v2289, %v954
    %v2354 = vadd.f32 %v2290, %v954
    %v2355 = vadd.f32 %v2291, %v954
    %v2356 = vadd.f32 %v2292, %v954
    %v2357 = vadd.f32 %v2293, %v954
    %v2358 = vadd.f32 %v2294, %v954
    %v2359 = vadd.f32 %v2295, %v954
    %v2360 = vadd.f32 %v2296, %v954
    %v2361 = vadd.f32 %v2297, %v955
    %v2362 = vadd.f32 %v2298, %v955
    %v2363 = vadd.f32 %v2299, %v955
    %v2364 = vadd.f32 %v2300, %v955
    %v2365 = vadd.f32 %v2301, %v955
    %v2366 = vadd.f32 %v2302, %v955
    %v2367 = vadd.f32 %v2303, %v955
    %v2368 = vadd.f32 %v2304, %v955
    %v2369 = vadd.f32 %v2305, %v956
    %v2370 = vadd.f32 %v2306, %v956
    %v2371 = vadd.f32 %v2307, %v956
    %v2372 = vadd.f32 %v2308, %v956
    %v2373 = vadd.f32 %v2309, %v956
    %v2374 = vadd.f32 %v2310, %v956
    %v2375 = vadd.f32 %v2311, %v956
    %v2376 = vadd.f32 %v2312, %v956
    %v2377 = vadd.f32 %v2313, %v957
    %v2378 = vadd.f32 %v2314, %v957
    %v2379 = vadd.f32 %v2315, %v957
    %v2380 = vadd.f32 %v2316, %v957
    %v2381 = vadd.f32 %v2317, %v957
    %v2382 = vadd.f32 %v2318, %v957
    %v2383 = vadd.f32 %v2319, %v957
    %v2384 = vadd.f32 %v2320, %v957
    %v2385 = vadd.f32 %v2321, %v958
    %v2386 = vadd.f32 %v2322, %v958
    %v2387 = vadd.f32 %v2323, %v958
    %v2388 = vadd.f32 %v2324, %v958
    %v2389 = vadd.f32 %v2325, %v958
    %v2390 = vadd.f32 %v2326, %v958
    %v2391 = vadd.f32 %v2327, %v958
    %v2392 = vadd.f32 %v2328, %v958
    %v2393 = vadd.f32 %v2329, %v959
    %v2394 = vadd.f32 %v2330, %v959
    %v2395 = vadd.f32 %v2331, %v959
    %v2396 = vadd.f32 %v2332, %v959
    %v2397 = vadd.f32 %v2333, %v959
    %v2398 = vadd.f32 %v2334, %v959
    %v2399 = vadd.f32 %v2335, %v959
    %v2400 = vadd.f32 %v2336, %v959
    %v2401 = vpack.c.bf16 %v2338, %v2337
    %v2402 = vpack.c.bf16 %v2340, %v2339
    %v2403 = vpack.c.bf16 %v2342, %v2341
    %v2404 = vpack.c.bf16 %v2344, %v2343
    %v2405 = vpack.c.bf16 %v2346, %v2345
    %v2406 = vpack.c.bf16 %v2348, %v2347
    %v2407 = vpack.c.bf16 %v2350, %v2349
    %v2408 = vpack.c.bf16 %v2352, %v2351
    %v2409 = vpack.c.bf16 %v2354, %v2353
    %v2410 = vpack.c.bf16 %v2356, %v2355
    %v2411 = vpack.c.bf16 %v2358, %v2357
    %v2412 = vpack.c.bf16 %v2360, %v2359
    %v2413 = vpack.c.bf16 %v2362, %v2361
    %v2414 = vpack.c.bf16 %v2364, %v2363
    %v2415 = vpack.c.bf16 %v2366, %v2365
    %v2416 = vpack.c.bf16 %v2368, %v2367
    %v2417 = vpack.c.bf16 %v2370, %v2369
    %v2418 = vpack.c.bf16 %v2372, %v2371
    %v2419 = vpack.c.bf16 %v2374, %v2373
    %v2420 = vpack.c.bf16 %v2376, %v2375
    %v2421 = vpack.c.bf16 %v2378, %v2377
    %v2422 = vpack.c.bf16 %v2380, %v2379
    %v2423 = vpack.c.bf16 %v2382, %v2381
    %v2424 = vpack.c.bf16 %v2384, %v2383
    %v2425 = vpack.c.bf16 %v2386, %v2385
    %v2426 = vpack.c.bf16 %v2388, %v2387
    %v2427 = vpack.c.bf16 %v2390, %v2389
    %v2428 = vpack.c.bf16 %v2392, %v2391
    %v2429 = vpack.c.bf16 %v2394, %v2393
    %v2430 = vpack.c.bf16 %v2396, %v2395
    %v2431 = vpack.c.bf16 %v2398, %v2397
    %v2432 = vpack.c.bf16 %v2400, %v2399
    %v2433 = vunpack.c.l.bf16 %v2401
    %v2434 = vunpack.c.h.bf16 %v2401
    %v2435 = vunpack.c.l.bf16 %v2402
    %v2436 = vunpack.c.h.bf16 %v2402
    %v2437 = vunpack.c.l.bf16 %v2403
    %v2438 = vunpack.c.h.bf16 %v2403
    %v2439 = vunpack.c.l.bf16 %v2404
    %v2440 = vunpack.c.h.bf16 %v2404
    %v2441 = vunpack.c.l.bf16 %v2405
    %v2442 = vunpack.c.h.bf16 %v2405
    %v2443 = vunpack.c.l.bf16 %v2406
    %v2444 = vunpack.c.h.bf16 %v2406
    %v2445 = vunpack.c.l.bf16 %v2407
    %v2446 = vunpack.c.h.bf16 %v2407
    %v2447 = vunpack.c.l.bf16 %v2408
    %v2448 = vunpack.c.h.bf16 %v2408
    %v2449 = vunpack.c.l.bf16 %v2409
    %v2450 = vunpack.c.h.bf16 %v2409
    %v2451 = vunpack.c.l.bf16 %v2410
    %v2452 = vunpack.c.h.bf16 %v2410
    %v2453 = vunpack.c.l.bf16 %v2411
    %v2454 = vunpack.c.h.bf16 %v2411
    %v2455 = vunpack.c.l.bf16 %v2412
    %v2456 = vunpack.c.h.bf16 %v2412
    %v2457 = vunpack.c.l.bf16 %v2413
    %v2458 = vunpack.c.h.bf16 %v2413
    %v2459 = vunpack.c.l.bf16 %v2414
    %v2460 = vunpack.c.h.bf16 %v2414
    %v2461 = vunpack.c.l.bf16 %v2415
    %v2462 = vunpack.c.h.bf16 %v2415
    %v2463 = vunpack.c.l.bf16 %v2416
    %v2464 = vunpack.c.h.bf16 %v2416
    %v2465 = vunpack.c.l.bf16 %v2417
    %v2466 = vunpack.c.h.bf16 %v2417
    %v2467 = vunpack.c.l.bf16 %v2418
    %v2468 = vunpack.c.h.bf16 %v2418
    %v2469 = vunpack.c.l.bf16 %v2419
    %v2470 = vunpack.c.h.bf16 %v2419
    %v2471 = vunpack.c.l.bf16 %v2420
    %v2472 = vunpack.c.h.bf16 %v2420
    %v2473 = vunpack.c.l.bf16 %v2421
    %v2474 = vunpack.c.h.bf16 %v2421
    %v2475 = vunpack.c.l.bf16 %v2422
    %v2476 = vunpack.c.h.bf16 %v2422
    %v2477 = vunpack.c.l.bf16 %v2423
    %v2478 = vunpack.c.h.bf16 %v2423
    %v2479 = vunpack.c.l.bf16 %v2424
    %v2480 = vunpack.c.h.bf16 %v2424
    %v2481 = vunpack.c.l.bf16 %v2425
    %v2482 = vunpack.c.h.bf16 %v2425
    %v2483 = vunpack.c.l.bf16 %v2426
    %v2484 = vunpack.c.h.bf16 %v2426
    %v2485 = vunpack.c.l.bf16 %v2427
    %v2486 = vunpack.c.h.bf16 %v2427
    %v2487 = vunpack.c.l.bf16 %v2428
    %v2488 = vunpack.c.h.bf16 %v2428
    %v2489 = vunpack.c.l.bf16 %v2429
    %v2490 = vunpack.c.h.bf16 %v2429
    %v2491 = vunpack.c.l.bf16 %v2430
    %v2492 = vunpack.c.h.bf16 %v2430
    %v2493 = vunpack.c.l.bf16 %v2431
    %v2494 = vunpack.c.h.bf16 %v2431
    %v2495 = vunpack.c.l.bf16 %v2432
    %v2496 = vunpack.c.h.bf16 %v2432
    %v2497 = vmax.f32 %v2433, 0.0
    %v2498 = vmax.f32 %v2434, 0.0
    %v2499 = vmax.f32 %v2435, 0.0
    %v2500 = vmax.f32 %v2436, 0.0
    %v2501 = vmax.f32 %v2437, 0.0
    %v2502 = vmax.f32 %v2438, 0.0
    %v2503 = vmax.f32 %v2439, 0.0
    %v2504 = vmax.f32 %v2440, 0.0
    %v2505 = vmax.f32 %v2441, 0.0
    %v2506 = vmax.f32 %v2442, 0.0
    %v2507 = vmax.f32 %v2443, 0.0
    %v2508 = vmax.f32 %v2444, 0.0
    %v2509 = vmax.f32 %v2445, 0.0
    %v2510 = vmax.f32 %v2446, 0.0
    %v2511 = vmax.f32 %v2447, 0.0
    %v2512 = vmax.f32 %v2448, 0.0
    %v2513 = vmax.f32 %v2449, 0.0
    %v2514 = vmax.f32 %v2450, 0.0
    %v2515 = vmax.f32 %v2451, 0.0
    %v2516 = vmax.f32 %v2452, 0.0
    %v2517 = vmax.f32 %v2453, 0.0
    %v2518 = vmax.f32 %v2454, 0.0
    %v2519 = vmax.f32 %v2455, 0.0
    %v2520 = vmax.f32 %v2456, 0.0
    %v2521 = vmax.f32 %v2457, 0.0
    %v2522 = vmax.f32 %v2458, 0.0
    %v2523 = vmax.f32 %v2459, 0.0
    %v2524 = vmax.f32 %v2460, 0.0
    %v2525 = vmax.f32 %v2461, 0.0
    %v2526 = vmax.f32 %v2462, 0.0
    %v2527 = vmax.f32 %v2463, 0.0
    %v2528 = vmax.f32 %v2464, 0.0
    %v2529 = vmax.f32 %v2465, 0.0
    %v2530 = vmax.f32 %v2466, 0.0
    %v2531 = vmax.f32 %v2467, 0.0
    %v2532 = vmax.f32 %v2468, 0.0
    %v2533 = vmax.f32 %v2469, 0.0
    %v2534 = vmax.f32 %v2470, 0.0
    %v2535 = vmax.f32 %v2471, 0.0
    %v2536 = vmax.f32 %v2472, 0.0
    %v2537 = vmax.f32 %v2473, 0.0
    %v2538 = vmax.f32 %v2474, 0.0
    %v2539 = vmax.f32 %v2475, 0.0
    %v2540 = vmax.f32 %v2476, 0.0
    %v2541 = vmax.f32 %v2477, 0.0
    %v2542 = vmax.f32 %v2478, 0.0
    %v2543 = vmax.f32 %v2479, 0.0
    %v2544 = vmax.f32 %v2480, 0.0
    %v2545 = vmax.f32 %v2481, 0.0
    %v2546 = vmax.f32 %v2482, 0.0
    %v2547 = vmax.f32 %v2483, 0.0
    %v2548 = vmax.f32 %v2484, 0.0
    %v2549 = vmax.f32 %v2485, 0.0
    %v2550 = vmax.f32 %v2486, 0.0
    %v2551 = vmax.f32 %v2487, 0.0
    %v2552 = vmax.f32 %v2488, 0.0
    %v2553 = vmax.f32 %v2489, 0.0
    %v2554 = vmax.f32 %v2490, 0.0
    %v2555 = vmax.f32 %v2491, 0.0
    %v2556 = vmax.f32 %v2492, 0.0
    %v2557 = vmax.f32 %v2493, 0.0
    %v2558 = vmax.f32 %v2494, 0.0
    %v2559 = vmax.f32 %v2495, 0.0
    %v2560 = vmax.f32 %v2496, 0.0
    %v2561 = vpack.c.bf16 %v2505, %v2497
    %v2562 = vpack.c.bf16 %v2506, %v2498
    %v2563 = vpack.c.bf16 %v2507, %v2499
    %v2564 = vpack.c.bf16 %v2508, %v2500
    %v2565 = vpack.c.bf16 %v2509, %v2501
    %v2566 = vpack.c.bf16 %v2510, %v2502
    %v2567 = vpack.c.bf16 %v2511, %v2503
    %v2568 = vpack.c.bf16 %v2512, %v2504
    %v2569 = vpack.c.bf16 %v2521, %v2513
    %v2570 = vpack.c.bf16 %v2522, %v2514
    %v2571 = vpack.c.bf16 %v2523, %v2515
    %v2572 = vpack.c.bf16 %v2524, %v2516
    %v2573 = vpack.c.bf16 %v2525, %v2517
    %v2574 = vpack.c.bf16 %v2526, %v2518
    %v2575 = vpack.c.bf16 %v2527, %v2519
    %v2576 = vpack.c.bf16 %v2528, %v2520
    %v2577 = vpack.c.bf16 %v2537, %v2529
    %v2578 = vpack.c.bf16 %v2538, %v2530
    %v2579 = vpack.c.bf16 %v2539, %v2531
    %v2580 = vpack.c.bf16 %v2540, %v2532
    %v2581 = vpack.c.bf16 %v2541, %v2533
    %v2582 = vpack.c.bf16 %v2542, %v2534
    %v2583 = vpack.c.bf16 %v2543, %v2535
    %v2584 = vpack.c.bf16 %v2544, %v2536
    %v2585 = vpack.c.bf16 %v2553, %v2545
    %v2586 = vpack.c.bf16 %v2554, %v2546
    %v2587 = vpack.c.bf16 %v2555, %v2547
    %v2588 = vpack.c.bf16 %v2556, %v2548
    %v2589 = vpack.c.bf16 %v2557, %v2549
    %v2590 = vpack.c.bf16 %v2558, %v2550
    %v2591 = vpack.c.bf16 %v2559, %v2551
    %v2592 = vpack.c.bf16 %v2560, %v2552
    %2593 = vmatpush.bf16.msra.mxu0 0
    %2594 = vmatpush.bf16.msra.mxu0 0
    %2595 = vmatpush.bf16.msra.mxu0 0
    %2596 = vmatpush.bf16.msra.mxu0 0
    %2597 = vmatpush.bf16.msra.mxu0 %v2585
    %2598 = vmatpush.bf16.msra.mxu0 %v2577
    %2599 = vmatpush.bf16.msra.mxu0 %v2569
    %2600 = vmatpush.bf16.msra.mxu0 %v2561
    %2601 = vmatmul.bf16.gmra.mxu0 %v1278
    %v2602 = vpop.f32.mrf.mxu0
    %v2603 = vadd.f32 %v1219, %v2602
    %v2604 = vpop.f32.mrf.mxu0
    %v2605 = vadd.f32 %v1224, %v2604
    %2606 = vmatmul.bf16.gmra.mxu0 %v1281
    %v2607 = vpop.f32.mrf.mxu0
    %v2608 = vadd.f32 %v1229, %v2607
    %v2609 = vpop.f32.mrf.mxu0
    %v2610 = vadd.f32 %v1234, %v2609
    %2611 = vmatmul.bf16.gmra.mxu0 %v1284
    %v2612 = vpop.f32.mrf.mxu0
    %v2613 = vadd.f32 %v1239, %v2612
    %v2614 = vpop.f32.mrf.mxu0
    %v2615 = vadd.f32 %v1244, %v2614
    %2616 = vmatmul.bf16.gmra.mxu0 %v1287
    %v2617 = vpop.f32.mrf.mxu0
    %v2618 = vadd.f32 %v1249, %v2617
    %v2619 = vpop.f32.mrf.mxu0
    %v2620 = vadd.f32 %v1254, %v2619
    %2621 = vdwg.mxu0
    %2622 = vmatpush.bf16.msra.mxu0 0
    %2623 = vmatpush.bf16.msra.mxu0 0
    %2624 = vmatpush.bf16.msra.mxu0 0
    %2625 = vmatpush.bf16.msra.mxu0 0
    %2626 = vmatpush.bf16.msra.mxu0 %v2586
    %2627 = vmatpush.bf16.msra.mxu0 %v2578
    %2628 = vmatpush.bf16.msra.mxu0 %v2570
    %2629 = vmatpush.bf16.msra.mxu0 %v2562
    %2630 = vmatmul.bf16.gmra.mxu0 %v1278
    %v2631 = vpop.f32.mrf.mxu0
    %v2632 = vadd.f32 %v1219, %v2631
    %v2633 = vpop.f32.mrf.mxu0
    %v2634 = vadd.f32 %v1224, %v2633
    %2635 = vmatmul.bf16.gmra.mxu0 %v1281
    %v2636 = vpop.f32.mrf.mxu0
    %v2637 = vadd.f32 %v1229, %v2636
    %v2638 = vpop.f32.mrf.mxu0
    %v2639 = vadd.f32 %v1234, %v2638
    %2640 = vmatmul.bf16.gmra.mxu0 %v1284
    %v2641 = vpop.f32.mrf.mxu0
    %v2642 = vadd.f32 %v1239, %v2641
    %v2643 = vpop.f32.mrf.mxu0
    %v2644 = vadd.f32 %v1244, %v2643
    %2645 = vmatmul.bf16.gmra.mxu0 %v1287
    %v2646 = vpop.f32.mrf.mxu0
    %v2647 = vadd.f32 %v1249, %v2646
    %v2648 = vpop.f32.mrf.mxu0
    %v2649 = vadd.f32 %v1254, %v2648
    %2650 = vdwg.mxu0
    %2651 = vmatpush.bf16.msra.mxu0 0
    %2652 = vmatpush.bf16.msra.mxu0 0
    %2653 = vmatpush.bf16.msra.mxu0 0
    %2654 = vmatpush.bf16.msra.mxu0 0
    %2655 = vmatpush.bf16.msra.mxu0 %v2587
    %2656 = vmatpush.bf16.msra.mxu0 %v2579
    %2657 = vmatpush.bf16.msra.mxu0 %v2571
    %2658 = vmatpush.bf16.msra.mxu0 %v2563
    %2659 = vmatmul.bf16.gmra.mxu0 %v1278
    %v2660 = vpop.f32.mrf.mxu0
    %v2661 = vadd.f32 %v1219, %v2660
    %v2662 = vpop.f32.mrf.mxu0
    %v2663 = vadd.f32 %v1224, %v2662
    %2664 = vmatmul.bf16.gmra.mxu0 %v1281
    %v2665 = vpop.f32.mrf.mxu0
    %v2666 = vadd.f32 %v1229, %v2665
    %v2667 = vpop.f32.mrf.mxu0
    %v2668 = vadd.f32 %v1234, %v2667
    %2669 = vmatmul.bf16.gmra.mxu0 %v1284
    %v2670 = vpop.f32.mrf.mxu0
    %v2671 = vadd.f32 %v1239, %v2670
    %v2672 = vpop.f32.mrf.mxu0
    %v2673 = vadd.f32 %v1244, %v2672
    %2674 = vmatmul.bf16.gmra.mxu0 %v1287
    %v2675 = vpop.f32.mrf.mxu0
    %v2676 = vadd.f32 %v1249, %v2675
    %v2677 = vpop.f32.mrf.mxu0
    %v2678 = vadd.f32 %v1254, %v2677
    %2679 = vdwg.mxu0
    %2680 = vmatpush.bf16.msra.mxu0 0
    %2681 = vmatpush.bf16.msra.mxu0 0
    %2682 = vmatpush.bf16.msra.mxu0 0
    %2683 = vmatpush.bf16.msra.mxu0 0
    %2684 = vmatpush.bf16.msra.mxu0 %v2588
    %2685 = vmatpush.bf16.msra.mxu0 %v2580
    %2686 = vmatpush.bf16.msra.mxu0 %v2572
    %2687 = vmatpush.bf16.msra.mxu0 %v2564
    %2688 = vmatmul.bf16.gmra.mxu0 %v1278
    %v2689 = vpop.f32.mrf.mxu0
    %v2690 = vadd.f32 %v1219, %v2689
    %v2691 = vpop.f32.mrf.mxu0
    %v2692 = vadd.f32 %v1224, %v2691
    %2693 = vmatmul.bf16.gmra.mxu0 %v1281
    %v2694 = vpop.f32.mrf.mxu0
    %v2695 = vadd.f32 %v1229, %v2694
    %v2696 = vpop.f32.mrf.mxu0
    %v2697 = vadd.f32 %v1234, %v2696
    %2698 = vmatmul.bf16.gmra.mxu0 %v1284
    %v2699 = vpop.f32.mrf.mxu0
    %v2700 = vadd.f32 %v1239, %v2699
    %v2701 = vpop.f32.mrf.mxu0
    %v2702 = vadd.f32 %v1244, %v2701
    %2703 = vmatmul.bf16.gmra.mxu0 %v1287
    %v2704 = vpop.f32.mrf.mxu0
    %v2705 = vadd.f32 %v1249, %v2704
    %v2706 = vpop.f32.mrf.mxu0
    %v2707 = vadd.f32 %v1254, %v2706
    %2708 = vdwg.mxu0
    %2709 = vmatpush.bf16.msra.mxu0 0
    %2710 = vmatpush.bf16.msra.mxu0 0
    %2711 = vmatpush.bf16.msra.mxu0 0
    %2712 = vmatpush.bf16.msra.mxu0 0
    %2713 = vmatpush.bf16.msra.mxu0 %v2589
    %2714 = vmatpush.bf16.msra.mxu0 %v2581
    %2715 = vmatpush.bf16.msra.mxu0 %v2573
    %2716 = vmatpush.bf16.msra.mxu0 %v2565
    %2717 = vmatmul.bf16.gmra.mxu0 %v1278
    %v2718 = vpop.f32.mrf.mxu0
    %v2719 = vadd.f32 %v1219, %v2718
    %v2720 = vpop.f32.mrf.mxu0
    %v2721 = vadd.f32 %v1224, %v2720
    %2722 = vmatmul.bf16.gmra.mxu0 %v1281
    %v2723 = vpop.f32.mrf.mxu0
    %v2724 = vadd.f32 %v1229, %v2723
    %v2725 = vpop.f32.mrf.mxu0
    %v2726 = vadd.f32 %v1234, %v2725
    %2727 = vmatmul.bf16.gmra.mxu0 %v1284
    %v2728 = vpop.f32.mrf.mxu0
    %v2729 = vadd.f32 %v1239, %v2728
    %v2730 = vpop.f32.mrf.mxu0
    %v2731 = vadd.f32 %v1244, %v2730
    %2732 = vmatmul.bf16.gmra.mxu0 %v1287
    %v2733 = vpop.f32.mrf.mxu0
    %v2734 = vadd.f32 %v1249, %v2733
    %v2735 = vpop.f32.mrf.mxu0
    %v2736 = vadd.f32 %v1254, %v2735
    %2737 = vdwg.mxu0
    %2738 = vmatpush.bf16.msra.mxu0 0
    %2739 = vmatpush.bf16.msra.mxu0 0
    %2740 = vmatpush.bf16.msra.mxu0 0
    %2741 = vmatpush.bf16.msra.mxu0 0
    %2742 = vmatpush.bf16.msra.mxu0 %v2590
    %2743 = vmatpush.bf16.msra.mxu0 %v2582
    %2744 = vmatpush.bf16.msra.mxu0 %v2574
    %2745 = vmatpush.bf16.msra.mxu0 %v2566
    %2746 = vmatmul.bf16.gmra.mxu0 %v1278
    %v2747 = vpop.f32.mrf.mxu0
    %v2748 = vadd.f32 %v1219, %v2747
    %v2749 = vpop.f32.mrf.mxu0
    %v2750 = vadd.f32 %v1224, %v2749
    %2751 = vmatmul.bf16.gmra.mxu0 %v1281
    %v2752 = vpop.f32.mrf.mxu0
    %v2753 = vadd.f32 %v1229, %v2752
    %v2754 = vpop.f32.mrf.mxu0
    %v2755 = vadd.f32 %v1234, %v2754
    %2756 = vmatmul.bf16.gmra.mxu0 %v1284
    %v2757 = vpop.f32.mrf.mxu0
    %v2758 = vadd.f32 %v1239, %v2757
    %v2759 = vpop.f32.mrf.mxu0
    %v2760 = vadd.f32 %v1244, %v2759
    %2761 = vmatmul.bf16.gmra.mxu0 %v1287
    %v2762 = vpop.f32.mrf.mxu0
    %v2763 = vadd.f32 %v1249, %v2762
    %v2764 = vpop.f32.mrf.mxu0
    %v2765 = vadd.f32 %v1254, %v2764
    %2766 = vdwg.mxu0
    %2767 = vmatpush.bf16.msra.mxu0 0
    %2768 = vmatpush.bf16.msra.mxu0 0
    %2769 = vmatpush.bf16.msra.mxu0 0
    %2770 = vmatpush.bf16.msra.mxu0 0
    %2771 = vmatpush.bf16.msra.mxu0 %v2591
    %2772 = vmatpush.bf16.msra.mxu0 %v2583
    %2773 = vmatpush.bf16.msra.mxu0 %v2575
    %2774 = vmatpush.bf16.msra.mxu0 %v2567
    %2775 = vmatmul.bf16.gmra.mxu0 %v1278
    %v2776 = vpop.f32.mrf.mxu0
    %v2777 = vadd.f32 %v1219, %v2776
    %v2778 = vpop.f32.mrf.mxu0
    %v2779 = vadd.f32 %v1224, %v2778
    %2780 = vmatmul.bf16.gmra.mxu0 %v1281
    %v2781 = vpop.f32.mrf.mxu0
    %v2782 = vadd.f32 %v1229, %v2781
    %v2783 = vpop.f32.mrf.mxu0
    %v2784 = vadd.f32 %v1234, %v2783
    %2785 = vmatmul.bf16.gmra.mxu0 %v1284
    %v2786 = vpop.f32.mrf.mxu0
    %v2787 = vadd.f32 %v1239, %v2786
    %v2788 = vpop.f32.mrf.mxu0
    %v2789 = vadd.f32 %v1244, %v2788
    %2790 = vmatmul.bf16.gmra.mxu0 %v1287
    %v2791 = vpop.f32.mrf.mxu0
    %v2792 = vadd.f32 %v1249, %v2791
    %v2793 = vpop.f32.mrf.mxu0
    %v2794 = vadd.f32 %v1254, %v2793
    %2795 = vdwg.mxu0
    %2796 = vmatpush.bf16.msra.mxu0 0
    %2797 = vmatpush.bf16.msra.mxu0 0
    %2798 = vmatpush.bf16.msra.mxu0 0
    %2799 = vmatpush.bf16.msra.mxu0 0
    %2800 = vmatpush.bf16.msra.mxu0 %v2592
    %2801 = vmatpush.bf16.msra.mxu0 %v2584
    %2802 = vmatpush.bf16.msra.mxu0 %v2576
    %2803 = vmatpush.bf16.msra.mxu0 %v2568
    %2804 = vmatmul.bf16.gmra.mxu0 %v1278
    %v2805 = vpop.f32.mrf.mxu0
    %v2806 = vadd.f32 %v1219, %v2805
    %v2807 = vpop.f32.mrf.mxu0
    %v2808 = vadd.f32 %v1224, %v2807
    %2809 = vmatmul.bf16.gmra.mxu0 %v1281
    %v2810 = vpop.f32.mrf.mxu0
    %v2811 = vadd.f32 %v1229, %v2810
    %v2812 = vpop.f32.mrf.mxu0
    %v2813 = vadd.f32 %v1234, %v2812
    %2814 = vmatmul.bf16.gmra.mxu0 %v1284
    %v2815 = vpop.f32.mrf.mxu0
    %v2816 = vadd.f32 %v1239, %v2815
    %v2817 = vpop.f32.mrf.mxu0
    %v2818 = vadd.f32 %v1244, %v2817
    %2819 = vmatmul.bf16.gmra.mxu0 %v1287
    %v2820 = vpop.f32.mrf.mxu0
    %v2821 = vadd.f32 %v1249, %v2820
    %v2822 = vpop.f32.mrf.mxu0
    %v2823 = vadd.f32 %v1254, %v2822
    %2824 = vdwg.mxu0
    %v2825 = vmax.f32 %v2603, 0.0
    %v2826 = vmax.f32 %v2632, 0.0
    %v2827 = vmax.f32 %v2661, 0.0
    %v2828 = vmax.f32 %v2690, 0.0
    %v2829 = vmax.f32 %v2719, 0.0
    %v2830 = vmax.f32 %v2748, 0.0
    %v2831 = vmax.f32 %v2777, 0.0
    %v2832 = vmax.f32 %v2806, 0.0
    %v2833 = vmax.f32 %v2605, 0.0
    %v2834 = vmax.f32 %v2634, 0.0
    %v2835 = vmax.f32 %v2663, 0.0
    %v2836 = vmax.f32 %v2692, 0.0
    %v2837 = vmax.f32 %v2721, 0.0
    %v2838 = vmax.f32 %v2750, 0.0
    %v2839 = vmax.f32 %v2779, 0.0
    %v2840 = vmax.f32 %v2808, 0.0
    %v2841 = vmax.f32 %v2608, 0.0
    %v2842 = vmax.f32 %v2637, 0.0
    %v2843 = vmax.f32 %v2666, 0.0
    %v2844 = vmax.f32 %v2695, 0.0
    %v2845 = vmax.f32 %v2724, 0.0
    %v2846 = vmax.f32 %v2753, 0.0
    %v2847 = vmax.f32 %v2782, 0.0
    %v2848 = vmax.f32 %v2811, 0.0
    %v2849 = vmax.f32 %v2610, 0.0
    %v2850 = vmax.f32 %v2639, 0.0
    %v2851 = vmax.f32 %v2668, 0.0
    %v2852 = vmax.f32 %v2697, 0.0
    %v2853 = vmax.f32 %v2726, 0.0
    %v2854 = vmax.f32 %v2755, 0.0
    %v2855 = vmax.f32 %v2784, 0.0
    %v2856 = vmax.f32 %v2813, 0.0
    %v2857 = vmax.f32 %v2613, 0.0
    %v2858 = vmax.f32 %v2642, 0.0
    %v2859 = vmax.f32 %v2671, 0.0
    %v2860 = vmax.f32 %v2700, 0.0
    %v2861 = vmax.f32 %v2729, 0.0
    %v2862 = vmax.f32 %v2758, 0.0
    %v2863 = vmax.f32 %v2787, 0.0
    %v2864 = vmax.f32 %v2816, 0.0
    %v2865 = vmax.f32 %v2615, 0.0
    %v2866 = vmax.f32 %v2644, 0.0
    %v2867 = vmax.f32 %v2673, 0.0
    %v2868 = vmax.f32 %v2702, 0.0
    %v2869 = vmax.f32 %v2731, 0.0
    %v2870 = vmax.f32 %v2760, 0.0
    %v2871 = vmax.f32 %v2789, 0.0
    %v2872 = vmax.f32 %v2818, 0.0
    %v2873 = vmax.f32 %v2618, 0.0
    %v2874 = vmax.f32 %v2647, 0.0
    %v2875 = vmax.f32 %v2676, 0.0
    %v2876 = vmax.f32 %v2705, 0.0
    %v2877 = vmax.f32 %v2734, 0.0
    %v2878 = vmax.f32 %v2763, 0.0
    %v2879 = vmax.f32 %v2792, 0.0
    %v2880 = vmax.f32 %v2821, 0.0
    %v2881 = vmax.f32 %v2620, 0.0
    %v2882 = vmax.f32 %v2649, 0.0
    %v2883 = vmax.f32 %v2678, 0.0
    %v2884 = vmax.f32 %v2707, 0.0
    %v2885 = vmax.f32 %v2736, 0.0
    %v2886 = vmax.f32 %v2765, 0.0
    %v2887 = vmax.f32 %v2794, 0.0
    %v2888 = vmax.f32 %v2823, 0.0
    %v2889 = vmax.f32 %v1641, %v2825
    %v2890 = vmax.f32 %v1642, %v2833
    %v2891 = vmax.f32 %v1643, %v2841
    %v2892 = vmax.f32 %v1644, %v2849
    %v2893 = vmax.f32 %v1645, %v2857
    %v2894 = vmax.f32 %v1646, %v2865
    %v2895 = vmax.f32 %v1647, %v2873
    %v2896 = vmax.f32 %v1648, %v2881
    %v2897 = vmax.f32 %v2889, %v2826
    %v2898 = vmax.f32 %v2890, %v2834
    %v2899 = vmax.f32 %v2891, %v2842
    %v2900 = vmax.f32 %v2892, %v2850
    %v2901 = vmax.f32 %v2893, %v2858
    %v2902 = vmax.f32 %v2894, %v2866
    %v2903 = vmax.f32 %v2895, %v2874
    %v2904 = vmax.f32 %v2896, %v2882
    %v2905 = vmax.f32 %v2897, %v2827
    %v2906 = vmax.f32 %v2898, %v2835
    %v2907 = vmax.f32 %v2899, %v2843
    %v2908 = vmax.f32 %v2900, %v2851
    %v2909 = vmax.f32 %v2901, %v2859
    %v2910 = vmax.f32 %v2902, %v2867
    %v2911 = vmax.f32 %v2903, %v2875
    %v2912 = vmax.f32 %v2904, %v2883
    %v2913 = vmax.f32 %v2905, %v2828
    %v2914 = vmax.f32 %v2906, %v2836
    %v2915 = vmax.f32 %v2907, %v2844
    %v2916 = vmax.f32 %v2908, %v2852
    %v2917 = vmax.f32 %v2909, %v2860
    %v2918 = vmax.f32 %v2910, %v2868
    %v2919 = vmax.f32 %v2911, %v2876
    %v2920 = vmax.f32 %v2912, %v2884
    %v2921 = vmax.f32 %v2913, %v2829
    %v2922 = vmax.f32 %v2914, %v2837
    %v2923 = vmax.f32 %v2915, %v2845
    %v2924 = vmax.f32 %v2916, %v2853
    %v2925 = vmax.f32 %v2917, %v2861
    %v2926 = vmax.f32 %v2918, %v2869
    %v2927 = vmax.f32 %v2919, %v2877
    %v2928 = vmax.f32 %v2920, %v2885
    %v2929 = vmax.f32 %v2921, %v2830
    %v2930 = vmax.f32 %v2922, %v2838
    %v2931 = vmax.f32 %v2923, %v2846
    %v2932 = vmax.f32 %v2924, %v2854
    %v2933 = vmax.f32 %v2925, %v2862
    %v2934 = vmax.f32 %v2926, %v2870
    %v2935 = vmax.f32 %v2927, %v2878
    %v2936 = vmax.f32 %v2928, %v2886
    %v2937 = vmax.f32 %v2929, %v2831
    %v2938 = vmax.f32 %v2930, %v2839
    %v2939 = vmax.f32 %v2931, %v2847
    %v2940 = vmax.f32 %v2932, %v2855
    %v2941 = vmax.f32 %v2933, %v2863
    %v2942 = vmax.f32 %v2934, %v2871
    %v2943 = vmax.f32 %v2935, %v2879
    %v2944 = vmax.f32 %v2936, %v2887
    %v2945 = vmax.f32 %v2937, %v2832
    %v2946 = vmax.f32 %v2938, %v2840
    %v2947 = vmax.f32 %v2939, %v2848
    %v2948 = vmax.f32 %v2940, %v2856
    %v2949 = vmax.f32 %v2941, %v2864
    %v2950 = vmax.f32 %v2942, %v2872
    %v2951 = vmax.f32 %v2943, %v2880
    %v2952 = vmax.f32 %v2944, %v2888
    %v2953 = vld [vmem:[#allocation2] sm:$0xff]
    %v2954 = vld [vmem:[#allocation2 + $0x8] sm:$0xff]
    %v2955 = vld [vmem:[#allocation2 + $0x10] sm:$0xff]
    %v2956 = vld [vmem:[#allocation2 + $0x18] sm:$0xff]
    %v2957 = vld [vmem:[#allocation2 + $0x20] sm:$0xff]
    %v2958 = vld [vmem:[#allocation2 + $0x28] sm:$0xff]
    %v2959 = vld [vmem:[#allocation2 + $0x30] sm:$0xff]
    %v2960 = vld [vmem:[#allocation2 + $0x38] sm:$0xff]
    %v2961 = vmax.f32 %v2953, %v2945
    %v2962 = vmax.f32 %v2954, %v2946
    %v2963 = vmax.f32 %v2955, %v2947
    %v2964 = vmax.f32 %v2956, %v2948
    %v2965 = vmax.f32 %v2957, %v2949
    %v2966 = vmax.f32 %v2958, %v2950
    %v2967 = vmax.f32 %v2959, %v2951
    %v2968 = vmax.f32 %v2960, %v2952
    %2969 = vst [vmem:[#allocation2] sm:$0xff] %v2961
    %2970 = vst [vmem:[#allocation2 + $0x8] sm:$0xff] %v2962
    %2971 = vst [vmem:[#allocation2 + $0x10] sm:$0xff] %v2963
    %2972 = vst [vmem:[#allocation2 + $0x18] sm:$0xff] %v2964
    %2973 = vst [vmem:[#allocation2 + $0x20] sm:$0xff] %v2965
    %2974 = vst [vmem:[#allocation2 + $0x28] sm:$0xff] %v2966
    %2975 = vst [vmem:[#allocation2 + $0x30] sm:$0xff] %v2967
    %2976 = vst [vmem:[#allocation2 + $0x38] sm:$0xff] %v2968
    // Predicated region
    $region34: #{tpu_custom_call.1} parent=1 // pred_check
      _
    $region35: #{tpu_custom_call.1} parent=1 // pred_check_branch
      %2978 = sbr.rel (0) target = $region37
    $region36: #{tpu_custom_call.1} parent=1 // pred_region
      %2980 = vsyncadd [#allocation3], 0
      %s2981 = sshll.u32 [#allocation2], 4
      %s2982 = int_to_ptr.vmem [resolvable:$true] %s2981
      %s2983 = sshll.u32 %s7, 4
      %s2984 = int_to_ptr.hbm [resolvable:$true] %s2983
      %2989 = dma.vmem_to_hbm [thread:$0]  %s2982, 1024, %s2984, [#allocation3], 128, 128, 8
    $region37: #{tpu_custom_call.1} parent=1 // pred_fallthru
      _
    // Predicated region
    $region38: #{tpu_custom_call.1} parent=1 // pred_check
      _
    $region39: #{tpu_custom_call.1} parent=1 // pred_check_branch
      %2991 = sbr.rel (0) target = $region41
    $region40: #{tpu_custom_call.1} parent=1 // pred_region
      %2993 = dma.done [#allocation3], 1024
    $region41: #{tpu_custom_call.1} parent=1 // pred_fallthru
      _
    %2994 = vsyncpa [#allocation3], 1

</llo_original>
